<compile_context>
chip_gen: v5e
topology: v5e:2x2
jax: 0.10.0
libtpu: 0.0.40
codegen_flags: <defaults>
</compile_context>

<pallas_src>
import jax
import jax.numpy as jnp
from jax import lax
from jax.experimental import pallas as pl
from jax.experimental.pallas import tpu as pltpu


# ----------------------------- elementwise helpers -----------------------------

def _erf(x):
    # Abramowitz & Stegun 7.1.26 polynomial approximation (|err| < 1.5e-7),
    # built only from ops with guaranteed Mosaic lowerings (exp/mul/add/select).
    a1, a2, a3, a4, a5 = 0.254829592, -0.284496736, 1.421413741, -1.453152027, 1.061405429
    p = 0.3275911
    ax = jnp.abs(x)
    t = 1.0 / (1.0 + p * ax)
    poly = ((((a5 * t + a4) * t + a3) * t + a2) * t + a1) * t
    pos = 1.0 - poly * jnp.exp(-ax * ax)
    return jnp.where(x >= 0.0, pos, -pos)


def _gelu(x):
    # exact (erf-based) GELU, matching torch.nn.functional.gelu default
    return 0.5 * x * (1.0 + _erf(x * 0.7071067811865476))


def _sigmoid(x):
    return 1.0 / (1.0 + jnp.exp(-x))


# --------------------------------- the kernel ----------------------------------

def hgnn_kernel(p1_ref, pi1_ref, p2_ref, pi2_ref, fea_ref, embg_ref,
                dd1_ref, dd2_ref, sp1_ref, sp2_ref,
                w12_ref, dwT_ref, db_ref, out_ref):
    f32 = jnp.float32
    cdt = fea_ref.dtype                     # bf16 in production, f32 in parity mode
    c = w12_ref.shape[1] // 2               # out_channels

    # Fused feature projection for both layers: (Bt,N,Cin)@(Cin,2C) -> (Bt,N,2C).
    ff = jnp.einsum("bnc,cd->bnd", fea_ref[...], w12_ref[...],
                    preferred_element_type=f32).astype(cdt)

    def spectral(p_ref, pi_ref, dd_ref, sp_ref, ffx):
        # diag(s_phi) @ Qphi @ diag(d * s_pinv) @ Qpinv @ ffx  — O(N^2*C) per batch.
        # Qphi/Qpinv arrive as int8 (or bf16/f32); the VPU widen hides under the DMA.
        t = jnp.einsum("bij,bjc->bic", pi_ref[...].astype(cdt), ffx,
                       preferred_element_type=f32)                         # (Bt,N,C) f32
        t = (t * dd_ref[...]).astype(cdt)                                  # row scale
        u = jnp.einsum("bij,bjc->bic", p_ref[...].astype(cdt), t,
                       preferred_element_type=f32)                         # (Bt,N,C) f32
        return u * sp_ref[...]                                             # row scale

    res = (spectral(p1_ref, pi1_ref, dd1_ref, sp1_ref, ff[..., :c])
           + spectral(p2_ref, pi2_ref, dd2_ref, sp2_ref, ff[..., c:]))     # (Bt,N,C) f32

    # Dense layer computed transposed so gelu/sigmoid + store run lane-dense
    # (N on the lane axis rather than K=top_k).
    zT = jnp.einsum("kc,bnc->bkn", dwT_ref[...], res,
                    preferred_element_type=f32) + db_ref[...]              # (Bt,K,N)
    out_ref[...] = _sigmoid(_gelu(zT) * embg_ref[...])


# ------------------------------- wrapper helpers -------------------------------

def _round_up(x, m):
    return (x + m - 1) // m * m


def _quantize_rows_int8(x):
    """Per-row symmetric int8 quantization along the last axis.

    x[..., n, :] ~= scale[..., n, 0] * q[..., n, :]
    """
    amax = jnp.max(jnp.abs(x), axis=-1, keepdims=True)
    scale = amax / 127.0
    safe = jnp.where(scale > 0.0, scale, 1.0)
    q = jnp.clip(jnp.round(x / safe), -127.0, 127.0).astype(jnp.int8)
    return q, scale.astype(jnp.float32)


def _pad_axis(x, axis, target):
    if x.shape[axis] == target:
        return x
    pad = [(0, 0)] * x.ndim
    pad[axis] = (0, target - x.shape[axis])
    return jnp.pad(x, pad)


def _vmem_limit_bytes():
    # Derive the scoped-VMEM budget from the part we are on: ~96 MiB on 128 MiB
    # parts (v5e/v6e), ~48 MiB on v7x (64 MiB physical).  Fallback is safe on all.
    try:
        cap = int(pltpu.get_tpu_info().vmem_capacity_bytes)
    except Exception:
        cap = 64 * 1024 * 1024
    return int(min(cap * 3 // 4, 100 * 1024 * 1024))


def _rnn_job_embedding(params, joblst, matmul_dtype):
    """Batched Elman RNN (tanh) over the masked job-embedding sequence.

    Entries with joblst == -1 carry the hidden state through, equivalent to
    PyTorch's `job_indices[job_indices != -1]` filtering.  Returns (B, N).
    Matmuls stream in `matmul_dtype` (bf16 in production) to halve the L*N^2
    recurrent-weight HBM traffic; hidden state and tanh stay f32.
    """
    safe = jnp.where(joblst < 0, 0, joblst)
    emb = params["item_factors"][safe].astype(matmul_dtype)                 # (B,L,C)
    valid = joblst >= 0                                                     # (B,L)
    xproj = jnp.einsum("blc,nc->bln", emb, params["wih"].astype(matmul_dtype),
                       preferred_element_type=jnp.float32) + params["bih"]  # (B,L,N)
    whh_t = params["whh"].T.astype(matmul_dtype)
    bhh = params["bhh"]

    def step(h, xs):
        x_t, m_t = xs                                                       # (B,N),(B,)
        hn = jnp.tanh(x_t + jnp.dot(h.astype(matmul_dtype), whh_t,
                                    preferred_element_type=jnp.float32) + bhh)
        return jnp.where(m_t[:, None], hn, h), None

    h0 = jnp.zeros((joblst.shape[0], params["whh"].shape[0]), jnp.float32)
    h, _ = lax.scan(step, h0, (jnp.swapaxes(xproj, 0, 1), valid.T))
    # TODO(synk): for large ncount, move this scan into a small Pallas kernel that
    # keeps whh resident in VMEM across the L timesteps (avoids L re-reads of N^2).
    return h                                                                # (B,N)


# --------------------------------- forward pass ---------------------------------

def hgnn_forward(params, phi1, phi1_inv, phi2, phi2_inv, fea, joblst,
                 spectral_dtype="int8"):
    """spectral_dtype selects how the four (N,N) operands are streamed from HBM:
       "int8" (per-row scaled, production default), "bfloat16", "float32" (parity).
    """
    assert spectral_dtype in ("int8", "bfloat16", "float32")
    B, N, _ = phi1.shape
    Cin = fea.shape[-1]
    C = params["w1"].shape[1]
    K = params["dense_w"].shape[1]
    f32 = jnp.float32
    cdt = f32 if spectral_dtype == "float32" else jnp.bfloat16

    # ---- wrapper-side glue ----
    w12 = jnp.concatenate([params["w1"], params["w2"]], axis=1).astype(cdt)   # (Cin,2C)
    dwT = params["dense_w"].T.astype(f32)                                     # (K,C)
    db = params["dense_b"].reshape(K, 1).astype(f32)                          # (K,1)
    d1 = params["d1"].astype(f32)[None]                                       # (1,N,1)
    d2 = params["d2"].astype(f32)[None]

    if spectral_dtype == "int8":
        # Per-row int8 for the dominant HBM stream; dequant scales folded into
        # the cheap (N,C) row scalings (dd on the phi_inv side, sp on the phi side).
        p1q, sp1 = _quantize_rows_int8(phi1)
        p2q, sp2 = _quantize_rows_int8(phi2)
        pi1q, spi1 = _quantize_rows_int8(phi1_inv)
        pi2q, spi2 = _quantize_rows_int8(phi2_inv)
        dd1, dd2 = d1 * spi1, d2 * spi2                                       # (B,N,1)
    else:
        p1q, p2q = phi1.astype(cdt), phi2.astype(cdt)
        pi1q, pi2q = phi1_inv.astype(cdt), phi2_inv.astype(cdt)
        ones = jnp.ones((B, N, 1), f32)
        sp1 = sp2 = ones
        dd1 = jnp.broadcast_to(d1, (B, N, 1))
        dd2 = jnp.broadcast_to(d2, (B, N, 1))

    # RNN hoisted out of the per-batch grid; only gelu(last hidden) enters the kernel.
    h = _rnn_job_embedding(params, joblst, cdt)                               # (B,N)
    embg = jax.nn.gelu(h, approximate=False).astype(f32)[:, None, :]          # (B,1,N)
    fea_c = fea.astype(cdt)

    # Zero-pad N to a lane-dense multiple of 128 when the overhead is small
    # (exact: padded rows/cols are zero and padded output columns are sliced off).
    Np = _round_up(N, 128)
    if Np - N > max(N // 8, 8):
        Np = _round_up(N, 8)            # 128-pad not worth the extra bytes
    if Np != N:
        def _pad2(a):
            return _pad_axis(_pad_axis(a, 1, Np), 2, Np)
        p1q, p2q, pi1q, pi2q = map(_pad2, (p1q, p2q, pi1q, pi2q))
        fea_c = _pad_axis(fea_c, 1, Np)
        embg = _pad_axis(embg, 2, Np)
        dd1, dd2, sp1, sp2 = (_pad_axis(a, 1, Np) for a in (dd1, dd2, sp1, sp2))

    # Batch blocking: amortize per-grid-step overhead at small N, but keep >= 2
    # grid steps when possible so both v7x TensorCores have work (megacore).
    bt = 1
    if Np < 512:
        for cand in (4, 2):
            if B % cand == 0 and B // cand >= 2:
                bt = cand
                break

    def batched(shape):
        nd = len(shape)
        return pl.BlockSpec((bt,) + shape, lambda i: (i,) + (0,) * nd)

    def const(shape):
        nd = len(shape)
        return pl.BlockSpec(shape, lambda i: (0,) * nd)

    out_t = pl.pallas_call(
        hgnn_kernel,
        out_shape=jax.ShapeDtypeStruct((B, K, Np), f32),
        grid=(B // bt,),
        in_specs=[
            batched((Np, Np)), batched((Np, Np)), batched((Np, Np)), batched((Np, Np)),
            batched((Np, Cin)), batched((1, Np)),
            batched((Np, 1)), batched((Np, 1)), batched((Np, 1)), batched((Np, 1)),
            # Grid-invariant operands below are tiny; their double-buffer waste is
            # negligible even inside v7x's 64 MiB VMEM.
            const((Cin, 2 * C)), const((K, C)), const((K, 1)),
        ],
        out_specs=batched((K, Np)),
        compiler_params=pltpu.CompilerParams(
            dimension_semantics=("parallel",),
            vmem_limit_bytes=_vmem_limit_bytes(),
        ),
    )(p1q, pi1q, p2q, pi2q, fea_c, embg, dd1, dd2, sp1, sp2, w12, dwT, db)
    # TODO(synk): if ncount grows past what 4 double-buffered (N,N) int8 blocks fit
    # in per-core VMEM (N ~> 2400 on v7x), add a row-tile grid axis over phi1/phi2
    # with t = diag(d*s_pinv) @ (Qpinv @ ff) cached once per batch in VMEM scratch.

    # Kernel emits (B, K, Np) for lane-dense stores; module output is (B, N, K).
    # (Kept f32 + transposed for drop-in parity; a consumer accepting (B,K,N) bf16
    #  could skip this transpose and halve the store bytes.)
    return jnp.transpose(out_t, (0, 2, 1))[:, :N, :]


# ----------------------------- params / reference ------------------------------

def init_params(key, in_channels, out_channels, ncount, top_k):
    keys = jax.random.split(key, 10)

    def xavier(k, shape):
        b = (6.0 / (shape[0] + shape[1])) ** 0.5
        return jax.random.uniform(k, shape, jnp.float32, -b, b)

    rb = 1.0 / (ncount ** 0.5)

    def uni(k, shape):
        return jax.random.uniform(k, shape, jnp.float32, -rb, rb)

    return {
        # HGNN_layer 1 / 2
        "w1": xavier(keys[0], (in_channels, out_channels)),
        "d1": jax.random.uniform(keys[1], (ncount, 1), jnp.float32, 0.9, 1.1),
        "w2": xavier(keys[2], (in_channels, out_channels)),
        "d2": jax.random.uniform(keys[3], (ncount, 1), jnp.float32, 0.9, 1.1),
        # dense (stored as (Cout, K) = weight.T so z = res @ dense_w + b)
        "dense_w": xavier(keys[4], (out_channels, top_k)),
        "dense_b": jnp.zeros((top_k,), jnp.float32),
        # item embedding
        "item_factors": 0.01 * jax.random.normal(keys[5], (ncount, out_channels), jnp.float32),
        # RNN(out_channels -> ncount), tanh, single layer
        "wih": uni(keys[6], (ncount, out_channels)),
        "whh": uni(keys[7], (ncount, ncount)),
        "bih": uni(keys[8], (ncount,)),
        "bhh": uni(keys[9], (ncount,)),
    }


def hgnn_reference(params, phi1, phi1_inv, phi2, phi2_inv, fea, joblst):
    """Pure-JAX f32 reference mirroring the PyTorch forward (original op order)."""
    B, N, _ = phi1.shape
    L = joblst.shape[1]
    outs, embs = [], []
    for i in range(B):
        idx = joblst[i]
        valid = idx >= 0
        safe = jnp.where(valid, idx, 0)
        e1 = params["item_factors"][safe]                                   # (L,C)
        h = jnp.zeros((N,), jnp.float32)
        for t in range(L):
            hn = jnp.tanh(e1[t] @ params["wih"].T + params["bih"]
                          + h @ params["whh"].T + params["bhh"])
            h = jnp.where(valid[t], hn, h)
        embs.append(h)

        def layer(phi, phi_inv, d, w):
            return ((phi * d.reshape(1, -1)) @ phi_inv) @ (fea[i] @ w)

        outs.append(layer(phi1[i], phi1_inv[i], params["d1"], params["w1"])
                    + layer(phi2[i], phi2_inv[i], params["d2"], params["w2"]))
    res = jnp.stack(outs)                                                   # (B,N,C)
    emb = jnp.stack(embs)                                                   # (B,N)
    res2 = jax.nn.gelu(res @ params["dense_w"] + params["dense_b"], approximate=False)
    return jax.nn.sigmoid(res2 * jax.nn.gelu(emb, approximate=False)[:, :, None])


# ------------------------------------ main --------------------------------------

if __name__ == "__main__":
    # small shapes: batch=4, ncount=16, in_channels=8, out_channels=8, top_k=4, joblen=8
    B, N, Cin, Cout, K, L = 4, 16, 8, 8, 4, 8
    key = jax.random.PRNGKey(0)
    kp, k1, k2, k3, k4, k5 = jax.random.split(key, 6)
    params = init_params(kp, Cin, Cout, N, K)

    phi1 = 0.3 * jax.random.normal(k1, (B, N, N), jnp.float32)
    phi1_inv = 0.3 * jax.random.normal(k2, (B, N, N), jnp.float32)
    phi2 = 0.3 * jax.random.normal(k3, (B, N, N), jnp.float32)
    phi2_inv = 0.3 * jax.random.normal(k4, (B, N, N), jnp.float32)
    fea = jax.random.normal(k5, (B, N, Cin), jnp.float32)
    joblst = jnp.array([[3, 7, 1, -1, 5, -1, 2, 9],
                        [0, 4, -1, 12, 9, 11, 15, -1],
                        [2, -1, 6, 1, 14, -1, -1, 8],
                        [10, 13, 5, 0, -1, 7, 3, -1]], dtype=jnp.int32)

    fwd = jax.jit(hgnn_forward, static_argnames="spectral_dtype")
    ref = hgnn_reference(params, phi1, phi1_inv, phi2, phi2_inv, fea, joblst)

    # f32 path: tight numerical parity with the reference
    out32 = jax.block_until_ready(
        fwd(params, phi1, phi1_inv, phi2, phi2_inv, fea, joblst,
            spectral_dtype="float32"))
    assert out32.shape == (B, N, K), out32.shape
    assert jnp.allclose(out32, ref, atol=1e-4, rtol=1e-4), \
        float(jnp.max(jnp.abs(out32 - ref)))

    # int8 path (production default): per-row quantized spectral operands,
    # bf16 MXU with f32 accumulation, scales folded into the diag(d) row scaling.
    out8 = jax.block_until_ready(
        fwd(params, phi1, phi1_inv, phi2, phi2_inv, fea, joblst,
            spectral_dtype="int8"))
    assert out8.shape == (B, N, K), out8.shape
    assert jnp.allclose(out8, ref, atol=5e-2, rtol=5e-2), \
        float(jnp.max(jnp.abs(out8 - ref)))

    print("KERNEL_OK")
</pallas_src>

<mosaic_0001>
module attributes {stable_mosaic.version = 11 : i64} {
  func.func @hgnn_kernel(%arg0: i32, %arg1: memref<2x16x16xf32, #tpu.memory_space<vmem>>, %arg2: memref<2x16x16xf32, #tpu.memory_space<vmem>>, %arg3: memref<2x16x16xf32, #tpu.memory_space<vmem>>, %arg4: memref<2x16x16xf32, #tpu.memory_space<vmem>>, %arg5: memref<2x16x8xf32, #tpu.memory_space<vmem>>, %arg6: memref<2x1x16xf32, #tpu.memory_space<vmem>>, %arg7: memref<2x16x1xf32, #tpu.memory_space<vmem>>, %arg8: memref<2x16x1xf32, #tpu.memory_space<vmem>>, %arg9: memref<2x16x1xf32, #tpu.memory_space<vmem>>, %arg10: memref<2x16x1xf32, #tpu.memory_space<vmem>>, %arg11: memref<8x16xf32, #tpu.memory_space<vmem>>, %arg12: memref<4x8xf32, #tpu.memory_space<vmem>>, %arg13: memref<4x1xf32, #tpu.memory_space<vmem>>, %arg14: memref<2x4x16xf32, #tpu.memory_space<vmem>>) attributes {dimension_semantics = [#tpu.dimension_semantics<parallel>], iteration_bounds = array<i64: 2>, scalar_prefetch = 0 : i64, scratch_operands = 0 : i64, tpu.core_type = #tpu.core_type<tc>, window_params = [{transform_indices = @transform_0, window_bounds = array<i64: 2, 16, 16>}, {transform_indices = @transform_1, window_bounds = array<i64: 2, 16, 16>}, {transform_indices = @transform_2, window_bounds = array<i64: 2, 16, 16>}, {transform_indices = @transform_3, window_bounds = array<i64: 2, 16, 16>}, {transform_indices = @transform_4, window_bounds = array<i64: 2, 16, 8>}, {transform_indices = @transform_5, window_bounds = array<i64: 2, 1, 16>}, {transform_indices = @transform_6, window_bounds = array<i64: 2, 16, 1>}, {transform_indices = @transform_7, window_bounds = array<i64: 2, 16, 1>}, {transform_indices = @transform_8, window_bounds = array<i64: 2, 16, 1>}, {transform_indices = @transform_9, window_bounds = array<i64: 2, 16, 1>}, {pipeline_mode = #tpu.pipeline_mode<synchronous>, transform_indices = @transform_10, window_bounds = array<i64: 8, 16>}, {pipeline_mode = #tpu.pipeline_mode<synchronous>, transform_indices = @transform_11, window_bounds = array<i64: 4, 8>}, {pipeline_mode = #tpu.pipeline_mode<synchronous>, transform_indices = @transform_12, window_bounds = array<i64: 4, 1>}, {transform_indices = @transform_13, window_bounds = array<i64: 2, 4, 16>}]} {
    %c0 = arith.constant 0 : index
    %c0_0 = arith.constant 0 : index
    %c0_1 = arith.constant 0 : index
    %0 = vector.load %arg5[%c0, %c0_0, %c0_1] : memref<2x16x8xf32, #tpu.memory_space<vmem>>, vector<2x16x8xf32>
    %c0_2 = arith.constant 0 : index
    %c0_3 = arith.constant 0 : index
    %1 = vector.load %arg11[%c0_2, %c0_3] : memref<8x16xf32, #tpu.memory_space<vmem>>, vector<8x16xf32>
    "tpu.trace_start"() <{level = 10 : i32, message = "bnc,cd->bnd"}> : () -> ()
    %cst = arith.constant dense<0.000000e+00> : vector<2x16x16xf32>
    %2 = tpu.matmul %0, %1, %cst {dimension_numbers = #tpu.dot_dimension_numbers<[2], [0], [0, 1], [1], [0, 0, 0, 1, 1, 1], [], []>} : vector<2x16x8xf32>, vector<8x16xf32>, vector<2x16x16xf32> -> vector<2x16x16xf32>
    "tpu.trace_stop"() : () -> ()
    %3 = vector.extract_strided_slice %2 {offsets = [0, 0, 0], sizes = [2, 16, 8], strides = [1, 1, 1]} : vector<2x16x16xf32> to vector<2x16x8xf32>
    %c0_4 = arith.constant 0 : index
    %c0_5 = arith.constant 0 : index
    %c0_6 = arith.constant 0 : index
    %4 = vector.load %arg2[%c0_4, %c0_5, %c0_6] : memref<2x16x16xf32, #tpu.memory_space<vmem>>, vector<2x16x16xf32>
    "tpu.trace_start"() <{level = 10 : i32, message = "bij,bjc->bic"}> : () -> ()
    %cst_7 = arith.constant dense<0.000000e+00> : vector<2x16x8xf32>
    %5 = tpu.matmul %4, %3, %cst_7 {dimension_numbers = #tpu.dot_dimension_numbers<[2], [1], [1], [2], [0, 0, 0, 1, 1, 2], [0], [0]>} : vector<2x16x16xf32>, vector<2x16x8xf32>, vector<2x16x8xf32> -> vector<2x16x8xf32>
    "tpu.trace_stop"() : () -> ()
    %c0_8 = arith.constant 0 : index
    %c0_9 = arith.constant 0 : index
    %c0_10 = arith.constant 0 : index
    %6 = vector.load %arg7[%c0_8, %c0_9, %c0_10] : memref<2x16x1xf32, #tpu.memory_space<vmem>>, vector<2x16x1xf32>
    %7 = vector.broadcast %6 : vector<2x16x1xf32> to vector<2x16x8xf32>
    %8 = arith.mulf %5, %7 : vector<2x16x8xf32>
    %c0_11 = arith.constant 0 : index
    %c0_12 = arith.constant 0 : index
    %c0_13 = arith.constant 0 : index
    %9 = vector.load %arg1[%c0_11, %c0_12, %c0_13] : memref<2x16x16xf32, #tpu.memory_space<vmem>>, vector<2x16x16xf32>
    "tpu.trace_start"() <{level = 10 : i32, message = "bij,bjc->bic"}> : () -> ()
    %cst_14 = arith.constant dense<0.000000e+00> : vector<2x16x8xf32>
    %10 = tpu.matmul %9, %8, %cst_14 {dimension_numbers = #tpu.dot_dimension_numbers<[2], [1], [1], [2], [0, 0, 0, 1, 1, 2], [0], [0]>} : vector<2x16x16xf32>, vector<2x16x8xf32>, vector<2x16x8xf32> -> vector<2x16x8xf32>
    "tpu.trace_stop"() : () -> ()
    %c0_15 = arith.constant 0 : index
    %c0_16 = arith.constant 0 : index
    %c0_17 = arith.constant 0 : index
    %11 = vector.load %arg9[%c0_15, %c0_16, %c0_17] : memref<2x16x1xf32, #tpu.memory_space<vmem>>, vector<2x16x1xf32>
    %12 = vector.broadcast %11 : vector<2x16x1xf32> to vector<2x16x8xf32>
    %13 = arith.mulf %10, %12 : vector<2x16x8xf32>
    %14 = vector.extract_strided_slice %2 {offsets = [0, 0, 8], sizes = [2, 16, 8], strides = [1, 1, 1]} : vector<2x16x16xf32> to vector<2x16x8xf32>
    %c0_18 = arith.constant 0 : index
    %c0_19 = arith.constant 0 : index
    %c0_20 = arith.constant 0 : index
    %15 = vector.load %arg4[%c0_18, %c0_19, %c0_20] : memref<2x16x16xf32, #tpu.memory_space<vmem>>, vector<2x16x16xf32>
    "tpu.trace_start"() <{level = 10 : i32, message = "bij,bjc->bic"}> : () -> ()
    %cst_21 = arith.constant dense<0.000000e+00> : vector<2x16x8xf32>
    %16 = tpu.matmul %15, %14, %cst_21 {dimension_numbers = #tpu.dot_dimension_numbers<[2], [1], [1], [2], [0, 0, 0, 1, 1, 2], [0], [0]>} : vector<2x16x16xf32>, vector<2x16x8xf32>, vector<2x16x8xf32> -> vector<2x16x8xf32>
    "tpu.trace_stop"() : () -> ()
    %c0_22 = arith.constant 0 : index
    %c0_23 = arith.constant 0 : index
    %c0_24 = arith.constant 0 : index
    %17 = vector.load %arg8[%c0_22, %c0_23, %c0_24] : memref<2x16x1xf32, #tpu.memory_space<vmem>>, vector<2x16x1xf32>
    %18 = vector.broadcast %17 : vector<2x16x1xf32> to vector<2x16x8xf32>
    %19 = arith.mulf %16, %18 : vector<2x16x8xf32>
    %c0_25 = arith.constant 0 : index
    %c0_26 = arith.constant 0 : index
    %c0_27 = arith.constant 0 : index
    %20 = vector.load %arg3[%c0_25, %c0_26, %c0_27] : memref<2x16x16xf32, #tpu.memory_space<vmem>>, vector<2x16x16xf32>
    "tpu.trace_start"() <{level = 10 : i32, message = "bij,bjc->bic"}> : () -> ()
    %cst_28 = arith.constant dense<0.000000e+00> : vector<2x16x8xf32>
    %21 = tpu.matmul %20, %19, %cst_28 {dimension_numbers = #tpu.dot_dimension_numbers<[2], [1], [1], [2], [0, 0, 0, 1, 1, 2], [0], [0]>} : vector<2x16x16xf32>, vector<2x16x8xf32>, vector<2x16x8xf32> -> vector<2x16x8xf32>
    "tpu.trace_stop"() : () -> ()
    %c0_29 = arith.constant 0 : index
    %c0_30 = arith.constant 0 : index
    %c0_31 = arith.constant 0 : index
    %22 = vector.load %arg10[%c0_29, %c0_30, %c0_31] : memref<2x16x1xf32, #tpu.memory_space<vmem>>, vector<2x16x1xf32>
    %23 = vector.broadcast %22 : vector<2x16x1xf32> to vector<2x16x8xf32>
    %24 = arith.mulf %21, %23 : vector<2x16x8xf32>
    %25 = arith.addf %13, %24 : vector<2x16x8xf32>
    %c0_32 = arith.constant 0 : index
    %c0_33 = arith.constant 0 : index
    %26 = vector.load %arg12[%c0_32, %c0_33] : memref<4x8xf32, #tpu.memory_space<vmem>>, vector<4x8xf32>
    "tpu.trace_start"() <{level = 10 : i32, message = "kc,bnc->bkn"}> : () -> ()
    %cst_34 = arith.constant dense<0.000000e+00> : vector<2x16x4xf32>
    %27 = tpu.matmul %25, %26, %cst_34 {dimension_numbers = #tpu.dot_dimension_numbers<[2], [1], [0, 1], [0], [0, 0, 0, 1, 1, 0], [], []>} : vector<2x16x8xf32>, vector<4x8xf32>, vector<2x16x4xf32> -> vector<2x16x4xf32>
    %28 = tpu.transpose %27, [0, 2, 1] : vector<2x16x4xf32> -> vector<2x4x16xf32>
    "tpu.trace_stop"() : () -> ()
    %c0_35 = arith.constant 0 : index
    %c0_36 = arith.constant 0 : index
    %29 = vector.load %arg13[%c0_35, %c0_36] : memref<4x1xf32, #tpu.memory_space<vmem>>, vector<4x1xf32>
    %30 = vector.shape_cast %29 : vector<4x1xf32> to vector<1x4x1xf32>
    %31 = vector.broadcast %30 : vector<1x4x1xf32> to vector<2x4x16xf32>
    %32 = arith.addf %28, %31 : vector<2x4x16xf32>
    %cst_37 = arith.constant 5.000000e-01 : f32
    %33 = vector.broadcast %cst_37 : f32 to vector<2x4x16xf32>
    %34 = arith.mulf %33, %32 : vector<2x4x16xf32>
    %cst_38 = arith.constant 0.707106769 : f32
    %35 = vector.broadcast %cst_38 : f32 to vector<2x4x16xf32>
    %36 = arith.mulf %32, %35 : vector<2x4x16xf32>
    %37 = math.absf %36 : vector<2x4x16xf32>
    %cst_39 = arith.constant 0.327591091 : f32
    %38 = vector.broadcast %cst_39 : f32 to vector<2x4x16xf32>
    %39 = arith.mulf %38, %37 : vector<2x4x16xf32>
    %cst_40 = arith.constant 1.000000e+00 : f32
    %40 = vector.broadcast %cst_40 : f32 to vector<2x4x16xf32>
    %41 = arith.addf %40, %39 : vector<2x4x16xf32>
    %cst_41 = arith.constant 1.000000e+00 : f32
    %42 = vector.broadcast %cst_41 : f32 to vector<2x4x16xf32>
    %43 = arith.divf %42, %41 : vector<2x4x16xf32>
    %cst_42 = arith.constant 1.06140542 : f32
    %44 = vector.broadcast %cst_42 : f32 to vector<2x4x16xf32>
    %45 = arith.mulf %44, %43 : vector<2x4x16xf32>
    %cst_43 = arith.constant -1.45315206 : f32
    %46 = vector.broadcast %cst_43 : f32 to vector<2x4x16xf32>
    %47 = arith.addf %45, %46 : vector<2x4x16xf32>
    %48 = arith.mulf %47, %43 : vector<2x4x16xf32>
    %cst_44 = arith.constant 1.42141378 : f32
    %49 = vector.broadcast %cst_44 : f32 to vector<2x4x16xf32>
    %50 = arith.addf %48, %49 : vector<2x4x16xf32>
    %51 = arith.mulf %50, %43 : vector<2x4x16xf32>
    %cst_45 = arith.constant -0.284496725 : f32
    %52 = vector.broadcast %cst_45 : f32 to vector<2x4x16xf32>
    %53 = arith.addf %51, %52 : vector<2x4x16xf32>
    %54 = arith.mulf %53, %43 : vector<2x4x16xf32>
    %cst_46 = arith.constant 0.254829586 : f32
    %55 = vector.broadcast %cst_46 : f32 to vector<2x4x16xf32>
    %56 = arith.addf %54, %55 : vector<2x4x16xf32>
    %57 = arith.mulf %56, %43 : vector<2x4x16xf32>
    %cst_47 = arith.constant 0.000000e+00 : f32
    %58 = vector.broadcast %cst_47 : f32 to vector<2x4x16xf32>
    %59 = arith.subf %58, %37 : vector<2x4x16xf32>
    %60 = arith.mulf %59, %37 : vector<2x4x16xf32>
    %61 = math.exp %60 : vector<2x4x16xf32>
    %62 = arith.mulf %57, %61 : vector<2x4x16xf32>
    %cst_48 = arith.constant 1.000000e+00 : f32
    %63 = vector.broadcast %cst_48 : f32 to vector<2x4x16xf32>
    %64 = arith.subf %63, %62 : vector<2x4x16xf32>
    %cst_49 = arith.constant 0.000000e+00 : f32
    %65 = vector.broadcast %cst_49 : f32 to vector<2x4x16xf32>
    %66 = arith.cmpf oge, %36, %65 : vector<2x4x16xf32>
    %cst_50 = arith.constant 0.000000e+00 : f32
    %67 = vector.broadcast %cst_50 : f32 to vector<2x4x16xf32>
    %68 = arith.subf %67, %64 : vector<2x4x16xf32>
    %69 = arith.select %66, %64, %68 : vector<2x4x16xi1>, vector<2x4x16xf32>
    %cst_51 = arith.constant 1.000000e+00 : f32
    %70 = vector.broadcast %cst_51 : f32 to vector<2x4x16xf32>
    %71 = arith.addf %70, %69 : vector<2x4x16xf32>
    %72 = arith.mulf %34, %71 : vector<2x4x16xf32>
    %c0_52 = arith.constant 0 : index
    %c0_53 = arith.constant 0 : index
    %c0_54 = arith.constant 0 : index
    %73 = vector.load %arg6[%c0_52, %c0_53, %c0_54] : memref<2x1x16xf32, #tpu.memory_space<vmem>>, vector<2x1x16xf32>
    %74 = vector.broadcast %73 : vector<2x1x16xf32> to vector<2x4x16xf32>
    %75 = arith.mulf %72, %74 : vector<2x4x16xf32>
    %cst_55 = arith.constant 0.000000e+00 : f32
    %76 = vector.broadcast %cst_55 : f32 to vector<2x4x16xf32>
    %77 = arith.subf %76, %75 : vector<2x4x16xf32>
    %78 = math.exp %77 : vector<2x4x16xf32>
    %cst_56 = arith.constant 1.000000e+00 : f32
    %79 = vector.broadcast %cst_56 : f32 to vector<2x4x16xf32>
    %80 = arith.addf %79, %78 : vector<2x4x16xf32>
    %cst_57 = arith.constant 1.000000e+00 : f32
    %81 = vector.broadcast %cst_57 : f32 to vector<2x4x16xf32>
    %82 = arith.divf %81, %80 : vector<2x4x16xf32>
    %c0_58 = arith.constant 0 : index
    %c0_59 = arith.constant 0 : index
    %c0_60 = arith.constant 0 : index
    %83 = vector.load %arg14[%c0_58, %c0_59, %c0_60] : memref<2x4x16xf32, #tpu.memory_space<vmem>>, vector<2x4x16xf32>
    tpu.vector_store %arg14[%c0_58, %c0_59, %c0_60], %82 {strides = array<i32>} : memref<2x4x16xf32, #tpu.memory_space<vmem>>, vector<2x4x16xf32>,
    return
  }
  func.func @transform_0(%arg0: i32) -> (i32, i32, i32) {
    %c0_i32 = arith.constant 0 : i32
    %c0_i32_0 = arith.constant 0 : i32
    %c0_i32_1 = arith.constant 0 : i32
    return %arg0, %c0_i32, %c0_i32_0 : i32, i32, i32
  }
  func.func @transform_1(%arg0: i32) -> (i32, i32, i32) {
    %c0_i32 = arith.constant 0 : i32
    %c0_i32_0 = arith.constant 0 : i32
    %c0_i32_1 = arith.constant 0 : i32
    return %arg0, %c0_i32, %c0_i32_0 : i32, i32, i32
  }
  func.func @transform_2(%arg0: i32) -> (i32, i32, i32) {
    %c0_i32 = arith.constant 0 : i32
    %c0_i32_0 = arith.constant 0 : i32
    %c0_i32_1 = arith.constant 0 : i32
    return %arg0, %c0_i32, %c0_i32_0 : i32, i32, i32
  }
  func.func @transform_3(%arg0: i32) -> (i32, i32, i32) {
    %c0_i32 = arith.constant 0 : i32
    %c0_i32_0 = arith.constant 0 : i32
    %c0_i32_1 = arith.constant 0 : i32
    return %arg0, %c0_i32, %c0_i32_0 : i32, i32, i32
  }
  func.func @transform_4(%arg0: i32) -> (i32, i32, i32) {
    %c0_i32 = arith.constant 0 : i32
    %c0_i32_0 = arith.constant 0 : i32
    %c0_i32_1 = arith.constant 0 : i32
    return %arg0, %c0_i32, %c0_i32_0 : i32, i32, i32
  }
  func.func @transform_5(%arg0: i32) -> (i32, i32, i32) {
    %c0_i32 = arith.constant 0 : i32
    %c0_i32_0 = arith.constant 0 : i32
    %c0_i32_1 = arith.constant 0 : i32
    return %arg0, %c0_i32, %c0_i32_0 : i32, i32, i32
  }
  func.func @transform_6(%arg0: i32) -> (i32, i32, i32) {
    %c0_i32 = arith.constant 0 : i32
    %c0_i32_0 = arith.constant 0 : i32
    %c0_i32_1 = arith.constant 0 : i32
    return %arg0, %c0_i32, %c0_i32_0 : i32, i32, i32
  }
  func.func @transform_7(%arg0: i32) -> (i32, i32, i32) {
    %c0_i32 = arith.constant 0 : i32
    %c0_i32_0 = arith.constant 0 : i32
    %c0_i32_1 = arith.constant 0 : i32
    return %arg0, %c0_i32, %c0_i32_0 : i32, i32, i32
  }
  func.func @transform_8(%arg0: i32) -> (i32, i32, i32) {
    %c0_i32 = arith.constant 0 : i32
    %c0_i32_0 = arith.constant 0 : i32
    %c0_i32_1 = arith.constant 0 : i32
    return %arg0, %c0_i32, %c0_i32_0 : i32, i32, i32
  }
  func.func @transform_9(%arg0: i32) -> (i32, i32, i32) {
    %c0_i32 = arith.constant 0 : i32
    %c0_i32_0 = arith.constant 0 : i32
    %c0_i32_1 = arith.constant 0 : i32
    return %arg0, %c0_i32, %c0_i32_0 : i32, i32, i32
  }
  func.func @transform_10(%arg0: i32) -> (i32, i32) {
    %c0_i32 = arith.constant 0 : i32
    %c0_i32_0 = arith.constant 0 : i32
    %c0_i32_1 = arith.constant 0 : i32
    return %c0_i32, %c0_i32_0 : i32, i32
  }
  func.func @transform_11(%arg0: i32) -> (i32, i32) {
    %c0_i32 = arith.constant 0 : i32
    %c0_i32_0 = arith.constant 0 : i32
    %c0_i32_1 = arith.constant 0 : i32
    return %c0_i32, %c0_i32_0 : i32, i32
  }
  func.func @transform_12(%arg0: i32) -> (i32, i32) {
    %c0_i32 = arith.constant 0 : i32
    %c0_i32_0 = arith.constant 0 : i32
    %c0_i32_1 = arith.constant 0 : i32
    return %c0_i32, %c0_i32_0 : i32, i32
  }
  func.func @transform_13(%arg0: i32) -> (i32, i32, i32) {
    %c0_i32 = arith.constant 0 : i32
    %c0_i32_0 = arith.constant 0 : i32
    %c0_i32_1 = arith.constant 0 : i32
    return %arg0, %c0_i32, %c0_i32_0 : i32, i32, i32
  }
}

</mosaic_0001>

<llo_original>
// kernel: custom-call
$region0: #{custom-call}
  %s0 = inlined_call_operand.vmem [shape: f32[4,16], index: 0, kind: output, shape index: {}]

// kernel: hgnn_forward.1
$region0: #{hgnn_forward.1}
  #allocation0 [shape = 'u32[]', space=smem, size = 0x4, offset = 0x4, fixed_abs, tag = 'smem constant byte address 0x4 - core index']
  #allocation1 [shape = 'u32[72,128]{1,0:T(1,128)}', space=vmem, size = 0x9000, scoped, tag = 'internal scratch']
  %s0 = inlined_call_operand.vmem [shape: f32[4,16,16], index: 0, kind: input, shape index: {}]
  %s1 = inlined_call_operand.vmem [shape: f32[4,16,16], index: 1, kind: input, shape index: {}]
  %s2 = inlined_call_operand.vmem [shape: f32[4,16,16], index: 2, kind: input, shape index: {}]
  %s3 = inlined_call_operand.vmem [shape: f32[4,16,16], index: 3, kind: input, shape index: {}]
  %s4 = inlined_call_operand.vmem [shape: f32[4,16,8], index: 4, kind: input, shape index: {}]
  %s5 = inlined_call_operand.vmem [shape: f32[4,1,16], index: 5, kind: input, shape index: {}]
  %s6 = inlined_call_operand.vmem [shape: f32[4,16,1], index: 6, kind: input, shape index: {}]
  %s7 = inlined_call_operand.vmem [shape: f32[4,16,1], index: 7, kind: input, shape index: {}]
  %s8 = inlined_call_operand.vmem [shape: f32[4,16,1], index: 8, kind: input, shape index: {}, may-alias: {8,9}]
  %s9 = inlined_call_operand.vmem [shape: f32[4,16,1], index: 9, kind: input, shape index: {}, may-alias: {8,9}]
  %s10 = inlined_call_operand.vmem [shape: f32[8,16], index: 10, kind: input, shape index: {}]
  %s11 = inlined_call_operand.vmem [shape: f32[4,8], index: 11, kind: input, shape index: {}]
  %s12 = inlined_call_operand.vmem [shape: f32[4,1], index: 12, kind: input, shape index: {}]
  %s13 = inlined_call_operand.hbm [shape: f32[4,4,16], index: 13, kind: output, shape index: {}]
  %s14 = sld [smem:[#allocation0]]
  $region85: #{hgnn_forward.1} parent=0
    _
  %s16 = ssub.s32 1, %s14
  %s17 = scalar_select 0, %s16, %s14
  $region1: #{hgnn_forward.1} parent=0
    #allocation2 [shape = 'u8[8192]{0}', space=vmem, size = 0x2000, scoped, tag = 'output window, operand 0']
    #allocation3 [shape = 's32[2]{0}', space=sflag, size = 0x8, scoped, tag = 'scoped memory for hgnn_forward.1']
    %18 = vsyncpa [#allocation3], 0
    %s19 = scalar_lea.sflag [#allocation3], 1
    %20 = vsyncpa %s19, 0
    loop: start=0, step=1, limit=4
    $region2: #{hgnn_forward.1} parent=1 // loop_pre_header
      _
    $region3: #{hgnn_forward.1} parent=1 // loop_header
      %s22 = sphi 0, %s26
      %p23 = scmp.ge.s32.totalorder %s22, 4
      %s32 = sphi 0, %s34
      %s35 = sphi 0, %s32
      %s36 = sphi 0, %s35
      %s52 = sphi 0, %s36
      %s58 = sphi 0, %s60
      %s61 = sphi 0, %s58
      %s62 = sphi 0, %s61
      %s78 = sphi 0, %s62
      %s84 = sphi 0, %s86
      %s87 = sphi 0, %s84
      %s88 = sphi 0, %s87
      %s104 = sphi 0, %s88
      %s110 = sphi 0, %s112
      %s113 = sphi 0, %s110
      %s114 = sphi 0, %s113
      %s130 = sphi 0, %s114
      %s136 = sphi 0, %s138
      %s139 = sphi 0, %s136
      %s140 = sphi 0, %s139
      %s156 = sphi 0, %s140
      %s162 = sphi 0, %s164
      %s165 = sphi 0, %s162
      %s166 = sphi 0, %s165
      %s182 = sphi 0, %s166
      %s188 = sphi 0, %s190
      %s191 = sphi 0, %s188
      %s192 = sphi 0, %s191
      %s208 = sphi 0, %s192
      %s214 = sphi 0, %s216
      %s217 = sphi 0, %s214
      %s218 = sphi 0, %s217
      %s234 = sphi 0, %s218
      %s240 = sphi 0, %s242
      %s243 = sphi 0, %s240
      %s244 = sphi 0, %s243
      %s260 = sphi 0, %s244
      %s266 = sphi 0, %s268
      %s269 = sphi 0, %s266
      %s270 = sphi 0, %s269
      %s286 = sphi 0, %s270
      %s290 = sphi 0, %s290
      %s292 = sphi 0, %s290
      %s293 = sphi 0, %s292
      %s307 = sphi 0, %s293
      %s311 = sphi 0, %s311
      %s313 = sphi 0, %s311
      %s314 = sphi 0, %s313
      %s328 = sphi 0, %s314
      %s332 = sphi 0, %s332
      %s334 = sphi 0, %s332
      %s335 = sphi 0, %s334
      %s349 = sphi 0, %s335
      %s355 = sphi 0, %s357
      %s358 = sphi 0, %s355
      %s359 = sphi 0, %s358
      %s375 = sphi 0, %s359
    $region4: #{hgnn_forward.1} parent=1 // loop_header_branch
      %25 = sbr.rel (%p23) target = $region8
    $region5: #{hgnn_forward.1} parent=1 // loop_body
      %s27 = ssub.s32 %s22, 1
      %s28 = ssub.s32 %s22, 2
      %s29 = sadd.s32 %s22, 1
      %s30 = ssub.s32 %s22, %s29
      %p31 = scmp.eq.s32.totalorder %s30, 0
      %s33 = sadd.s32 %s32, 1
      %s34 = scalar_select %p31, %s32, %s33
      %p37 = pneg %p31
      %p38 = scmp.eq.s32.totalorder %s22, 1
      %p39 = por %p37, %p38
      %p40 = scmp.ne.s32.totalorder %s32, %s35
      %p41 = scmp.eq.s32.totalorder %s22, 0
      %p42 = por %p40, %p41
      %p43 = scmp.ne.s32.totalorder %s32, %s35
      %p44 = scmp.eq.s32.totalorder %s27, 1
      %p45 = por %p43, %p44
      %p46 = scmp.ne.s32.totalorder %s35, %s36
      %p47 = scmp.eq.s32.totalorder %s27, 0
      %p48 = por %p46, %p47
      %p49 = scmp.ne.s32.totalorder %s35, %s36
      %p50 = scmp.eq.s32.totalorder %s28, 1
      %p51 = por %p49, %p50
      %p53 = scmp.ne.s32.totalorder %s36, %s52
      %p54 = scmp.eq.s32.totalorder %s28, 0
      %p55 = por %p53, %p54
      %s56 = ssub.s32 %s22, %s29
      %p57 = scmp.eq.s32.totalorder %s56, 0
      %s59 = sadd.s32 %s58, 1
      %s60 = scalar_select %p57, %s58, %s59
      %p63 = pneg %p57
      %p64 = scmp.eq.s32.totalorder %s22, 1
      %p65 = por %p63, %p64
      %p66 = scmp.ne.s32.totalorder %s58, %s61
      %p67 = scmp.eq.s32.totalorder %s22, 0
      %p68 = por %p66, %p67
      %p69 = scmp.ne.s32.totalorder %s58, %s61
      %p70 = scmp.eq.s32.totalorder %s27, 1
      %p71 = por %p69, %p70
      %p72 = scmp.ne.s32.totalorder %s61, %s62
      %p73 = scmp.eq.s32.totalorder %s27, 0
      %p74 = por %p72, %p73
      %p75 = scmp.ne.s32.totalorder %s61, %s62
      %p76 = scmp.eq.s32.totalorder %s28, 1
      %p77 = por %p75, %p76
      %p79 = scmp.ne.s32.totalorder %s62, %s78
      %p80 = scmp.eq.s32.totalorder %s28, 0
      %p81 = por %p79, %p80
      %s82 = ssub.s32 %s22, %s29
      %p83 = scmp.eq.s32.totalorder %s82, 0
      %s85 = sadd.s32 %s84, 1
      %s86 = scalar_select %p83, %s84, %s85
      %p89 = pneg %p83
      %p90 = scmp.eq.s32.totalorder %s22, 1
      %p91 = por %p89, %p90
      %p92 = scmp.ne.s32.totalorder %s84, %s87
      %p93 = scmp.eq.s32.totalorder %s22, 0
      %p94 = por %p92, %p93
      %p95 = scmp.ne.s32.totalorder %s84, %s87
      %p96 = scmp.eq.s32.totalorder %s27, 1
      %p97 = por %p95, %p96
      %p98 = scmp.ne.s32.totalorder %s87, %s88
      %p99 = scmp.eq.s32.totalorder %s27, 0
      %p100 = por %p98, %p99
      %p101 = scmp.ne.s32.totalorder %s87, %s88
      %p102 = scmp.eq.s32.totalorder %s28, 1
      %p103 = por %p101, %p102
      %p105 = scmp.ne.s32.totalorder %s88, %s104
      %p106 = scmp.eq.s32.totalorder %s28, 0
      %p107 = por %p105, %p106
      %s108 = ssub.s32 %s22, %s29
      %p109 = scmp.eq.s32.totalorder %s108, 0
      %s111 = sadd.s32 %s110, 1
      %s112 = scalar_select %p109, %s110, %s111
      %p115 = pneg %p109
      %p116 = scmp.eq.s32.totalorder %s22, 1
      %p117 = por %p115, %p116
      %p118 = scmp.ne.s32.totalorder %s110, %s113
      %p119 = scmp.eq.s32.totalorder %s22, 0
      %p120 = por %p118, %p119
      %p121 = scmp.ne.s32.totalorder %s110, %s113
      %p122 = scmp.eq.s32.totalorder %s27, 1
      %p123 = por %p121, %p122
      %p124 = scmp.ne.s32.totalorder %s113, %s114
      %p125 = scmp.eq.s32.totalorder %s27, 0
      %p126 = por %p124, %p125
      %p127 = scmp.ne.s32.totalorder %s113, %s114
      %p128 = scmp.eq.s32.totalorder %s28, 1
      %p129 = por %p127, %p128
      %p131 = scmp.ne.s32.totalorder %s114, %s130
      %p132 = scmp.eq.s32.totalorder %s28, 0
      %p133 = por %p131, %p132
      %s134 = ssub.s32 %s22, %s29
      %p135 = scmp.eq.s32.totalorder %s134, 0
      %s137 = sadd.s32 %s136, 1
      %s138 = scalar_select %p135, %s136, %s137
      %p141 = pneg %p135
      %p142 = scmp.eq.s32.totalorder %s22, 1
      %p143 = por %p141, %p142
      %p144 = scmp.ne.s32.totalorder %s136, %s139
      %p145 = scmp.eq.s32.totalorder %s22, 0
      %p146 = por %p144, %p145
      %p147 = scmp.ne.s32.totalorder %s136, %s139
      %p148 = scmp.eq.s32.totalorder %s27, 1
      %p149 = por %p147, %p148
      %p150 = scmp.ne.s32.totalorder %s139, %s140
      %p151 = scmp.eq.s32.totalorder %s27, 0
      %p152 = por %p150, %p151
      %p153 = scmp.ne.s32.totalorder %s139, %s140
      %p154 = scmp.eq.s32.totalorder %s28, 1
      %p155 = por %p153, %p154
      %p157 = scmp.ne.s32.totalorder %s140, %s156
      %p158 = scmp.eq.s32.totalorder %s28, 0
      %p159 = por %p157, %p158
      %s160 = ssub.s32 %s22, %s29
      %p161 = scmp.eq.s32.totalorder %s160, 0
      %s163 = sadd.s32 %s162, 1
      %s164 = scalar_select %p161, %s162, %s163
      %p167 = pneg %p161
      %p168 = scmp.eq.s32.totalorder %s22, 1
      %p169 = por %p167, %p168
      %p170 = scmp.ne.s32.totalorder %s162, %s165
      %p171 = scmp.eq.s32.totalorder %s22, 0
      %p172 = por %p170, %p171
      %p173 = scmp.ne.s32.totalorder %s162, %s165
      %p174 = scmp.eq.s32.totalorder %s27, 1
      %p175 = por %p173, %p174
      %p176 = scmp.ne.s32.totalorder %s165, %s166
      %p177 = scmp.eq.s32.totalorder %s27, 0
      %p178 = por %p176, %p177
      %p179 = scmp.ne.s32.totalorder %s165, %s166
      %p180 = scmp.eq.s32.totalorder %s28, 1
      %p181 = por %p179, %p180
      %p183 = scmp.ne.s32.totalorder %s166, %s182
      %p184 = scmp.eq.s32.totalorder %s28, 0
      %p185 = por %p183, %p184
      %s186 = ssub.s32 %s22, %s29
      %p187 = scmp.eq.s32.totalorder %s186, 0
      %s189 = sadd.s32 %s188, 1
      %s190 = scalar_select %p187, %s188, %s189
      %p193 = pneg %p187
      %p194 = scmp.eq.s32.totalorder %s22, 1
      %p195 = por %p193, %p194
      %p196 = scmp.ne.s32.totalorder %s188, %s191
      %p197 = scmp.eq.s32.totalorder %s22, 0
      %p198 = por %p196, %p197
      %p199 = scmp.ne.s32.totalorder %s188, %s191
      %p200 = scmp.eq.s32.totalorder %s27, 1
      %p201 = por %p199, %p200
      %p202 = scmp.ne.s32.totalorder %s191, %s192
      %p203 = scmp.eq.s32.totalorder %s27, 0
      %p204 = por %p202, %p203
      %p205 = scmp.ne.s32.totalorder %s191, %s192
      %p206 = scmp.eq.s32.totalorder %s28, 1
      %p207 = por %p205, %p206
      %p209 = scmp.ne.s32.totalorder %s192, %s208
      %p210 = scmp.eq.s32.totalorder %s28, 0
      %p211 = por %p209, %p210
      %s212 = ssub.s32 %s22, %s29
      %p213 = scmp.eq.s32.totalorder %s212, 0
      %s215 = sadd.s32 %s214, 1
      %s216 = scalar_select %p213, %s214, %s215
      %p219 = pneg %p213
      %p220 = scmp.eq.s32.totalorder %s22, 1
      %p221 = por %p219, %p220
      %p222 = scmp.ne.s32.totalorder %s214, %s217
      %p223 = scmp.eq.s32.totalorder %s22, 0
      %p224 = por %p222, %p223
      %p225 = scmp.ne.s32.totalorder %s214, %s217
      %p226 = scmp.eq.s32.totalorder %s27, 1
      %p227 = por %p225, %p226
      %p228 = scmp.ne.s32.totalorder %s217, %s218
      %p229 = scmp.eq.s32.totalorder %s27, 0
      %p230 = por %p228, %p229
      %p231 = scmp.ne.s32.totalorder %s217, %s218
      %p232 = scmp.eq.s32.totalorder %s28, 1
      %p233 = por %p231, %p232
      %p235 = scmp.ne.s32.totalorder %s218, %s234
      %p236 = scmp.eq.s32.totalorder %s28, 0
      %p237 = por %p235, %p236
      %s238 = ssub.s32 %s22, %s29
      %p239 = scmp.eq.s32.totalorder %s238, 0
      %s241 = sadd.s32 %s240, 1
      %s242 = scalar_select %p239, %s240, %s241
      %p245 = pneg %p239
      %p246 = scmp.eq.s32.totalorder %s22, 1
      %p247 = por %p245, %p246
      %p248 = scmp.ne.s32.totalorder %s240, %s243
      %p249 = scmp.eq.s32.totalorder %s22, 0
      %p250 = por %p248, %p249
      %p251 = scmp.ne.s32.totalorder %s240, %s243
      %p252 = scmp.eq.s32.totalorder %s27, 1
      %p253 = por %p251, %p252
      %p254 = scmp.ne.s32.totalorder %s243, %s244
      %p255 = scmp.eq.s32.totalorder %s27, 0
      %p256 = por %p254, %p255
      %p257 = scmp.ne.s32.totalorder %s243, %s244
      %p258 = scmp.eq.s32.totalorder %s28, 1
      %p259 = por %p257, %p258
      %p261 = scmp.ne.s32.totalorder %s244, %s260
      %p262 = scmp.eq.s32.totalorder %s28, 0
      %p263 = por %p261, %p262
      %s264 = ssub.s32 %s22, %s29
      %p265 = scmp.eq.s32.totalorder %s264, 0
      %s267 = sadd.s32 %s266, 1
      %s268 = scalar_select %p265, %s266, %s267
      %p271 = pneg %p265
      %p272 = scmp.eq.s32.totalorder %s22, 1
      %p273 = por %p271, %p272
      %p274 = scmp.ne.s32.totalorder %s266, %s269
      %p275 = scmp.eq.s32.totalorder %s22, 0
      %p276 = por %p274, %p275
      %p277 = scmp.ne.s32.totalorder %s266, %s269
      %p278 = scmp.eq.s32.totalorder %s27, 1
      %p279 = por %p277, %p278
      %p280 = scmp.ne.s32.totalorder %s269, %s270
      %p281 = scmp.eq.s32.totalorder %s27, 0
      %p282 = por %p280, %p281
      %p283 = scmp.ne.s32.totalorder %s269, %s270
      %p284 = scmp.eq.s32.totalorder %s28, 1
      %p285 = por %p283, %p284
      %p287 = scmp.ne.s32.totalorder %s270, %s286
      %p288 = scmp.eq.s32.totalorder %s28, 0
      %p289 = por %p287, %p288
      %s291 = sadd.s32 %s290, 1
      %p294 = scmp.eq.s32.totalorder %s22, 1
      %p295 = scmp.ne.s32.totalorder %s290, %s292
      %p296 = scmp.eq.s32.totalorder %s22, 0
      %p297 = por %p295, %p296
      %p298 = scmp.ne.s32.totalorder %s290, %s292
      %p299 = scmp.eq.s32.totalorder %s27, 1
      %p300 = por %p298, %p299
      %p301 = scmp.ne.s32.totalorder %s292, %s293
      %p302 = scmp.eq.s32.totalorder %s27, 0
      %p303 = por %p301, %p302
      %p304 = scmp.ne.s32.totalorder %s292, %s293
      %p305 = scmp.eq.s32.totalorder %s28, 1
      %p306 = por %p304, %p305
      %p308 = scmp.ne.s32.totalorder %s293, %s307
      %p309 = scmp.eq.s32.totalorder %s28, 0
      %p310 = por %p308, %p309
      %s312 = sadd.s32 %s311, 1
      %p315 = scmp.eq.s32.totalorder %s22, 1
      %p316 = scmp.ne.s32.totalorder %s311, %s313
      %p317 = scmp.eq.s32.totalorder %s22, 0
      %p318 = por %p316, %p317
      %p319 = scmp.ne.s32.totalorder %s311, %s313
      %p320 = scmp.eq.s32.totalorder %s27, 1
      %p321 = por %p319, %p320
      %p322 = scmp.ne.s32.totalorder %s313, %s314
      %p323 = scmp.eq.s32.totalorder %s27, 0
      %p324 = por %p322, %p323
      %p325 = scmp.ne.s32.totalorder %s313, %s314
      %p326 = scmp.eq.s32.totalorder %s28, 1
      %p327 = por %p325, %p326
      %p329 = scmp.ne.s32.totalorder %s314, %s328
      %p330 = scmp.eq.s32.totalorder %s28, 0
      %p331 = por %p329, %p330
      %s333 = sadd.s32 %s332, 1
      %p336 = scmp.eq.s32.totalorder %s22, 1
      %p337 = scmp.ne.s32.totalorder %s332, %s334
      %p338 = scmp.eq.s32.totalorder %s22, 0
      %p339 = por %p337, %p338
      %p340 = scmp.ne.s32.totalorder %s332, %s334
      %p341 = scmp.eq.s32.totalorder %s27, 1
      %p342 = por %p340, %p341
      %p343 = scmp.ne.s32.totalorder %s334, %s335
      %p344 = scmp.eq.s32.totalorder %s27, 0
      %p345 = por %p343, %p344
      %p346 = scmp.ne.s32.totalorder %s334, %s335
      %p347 = scmp.eq.s32.totalorder %s28, 1
      %p348 = por %p346, %p347
      %p350 = scmp.ne.s32.totalorder %s335, %s349
      %p351 = scmp.eq.s32.totalorder %s28, 0
      %p352 = por %p350, %p351
      %s353 = ssub.s32 %s22, %s29
      %p354 = scmp.eq.s32.totalorder %s353, 0
      %s356 = sadd.s32 %s355, 1
      %s357 = scalar_select %p354, %s355, %s356
      %p360 = pneg %p354
      %p361 = scmp.eq.s32.totalorder %s22, 1
      %p362 = por %p360, %p361
      %p363 = scmp.ne.s32.totalorder %s355, %s358
      %p364 = scmp.eq.s32.totalorder %s22, 0
      %p365 = por %p363, %p364
      %p366 = scmp.ne.s32.totalorder %s355, %s358
      %p367 = scmp.eq.s32.totalorder %s27, 1
      %p368 = por %p366, %p367
      %p369 = scmp.ne.s32.totalorder %s358, %s359
      %p370 = scmp.eq.s32.totalorder %s27, 0
      %p371 = por %p369, %p370
      %p372 = scmp.ne.s32.totalorder %s358, %s359
      %p373 = scmp.eq.s32.totalorder %s28, 1
      %p374 = por %p372, %p373
      %p376 = scmp.ne.s32.totalorder %s359, %s375
      %p377 = scmp.eq.s32.totalorder %s28, 0
      %p378 = por %p376, %p377
      %p379 = scmp.le.s32.totalorder 1, %s22
      %p380 = scmp.lt.s32.totalorder %s22, 3
      %p381 = pnand %p379, %p380
      %p382 = pneg %p381
      // Predicated region
      $region9: #{hgnn_forward.1} parent=5 // pred_check
        _
      $region10: #{hgnn_forward.1} parent=5 // pred_check_branch
        %384 = sbr.rel (%p381) target = $region12
      $region11: #{hgnn_forward.1} parent=5 // pred_region
        %s385 = ssub.s32 %s22, 1
        // Predicated region
        $region13: #{hgnn_forward.1} parent=11 // pred_check
          %p386 = pneg %p303
        $region14: #{hgnn_forward.1} parent=11 // pred_check_branch
          %388 = sbr.rel (%p386) target = $region16
        $region15: #{hgnn_forward.1} parent=11 // pred_region
          _
        $region16: #{hgnn_forward.1} parent=11 // pred_fallthru
          _
        // Predicated region
        $region17: #{hgnn_forward.1} parent=11 // pred_check
          %p389 = pneg %p324
        $region18: #{hgnn_forward.1} parent=11 // pred_check_branch
          %391 = sbr.rel (%p389) target = $region20
        $region19: #{hgnn_forward.1} parent=11 // pred_region
          _
        $region20: #{hgnn_forward.1} parent=11 // pred_fallthru
          _
        // Predicated region
        $region21: #{hgnn_forward.1} parent=11 // pred_check
          %p392 = pneg %p345
        $region22: #{hgnn_forward.1} parent=11 // pred_check_branch
          %394 = sbr.rel (%p392) target = $region24
        $region23: #{hgnn_forward.1} parent=11 // pred_region
          _
        $region24: #{hgnn_forward.1} parent=11 // pred_fallthru
          _
      $region12: #{hgnn_forward.1} parent=5 // pred_fallthru
        _
      %p395 = scmp.lt.s32.totalorder %s22, 2
      // Predicated region
      $region25: #{hgnn_forward.1} parent=5 // pred_check
        %p396 = pneg %p395
      $region26: #{hgnn_forward.1} parent=5 // pred_check_branch
        %398 = sbr.rel (%p396) target = $region28
      $region27: #{hgnn_forward.1} parent=5 // pred_region
        // Predicated region
        $region29: #{hgnn_forward.1} parent=27 // pred_check
          %p399 = pneg %p42
        $region30: #{hgnn_forward.1} parent=27 // pred_check_branch
          %401 = sbr.rel (%p399) target = $region32
        $region31: #{hgnn_forward.1} parent=27 // pred_region
          %s402 = smul.u32 2, %s22
          %p403 = scmp.lt.s32.totalorder %s402, 3
          %s404 = scalar_select %p403, %s402, 3
          %s405 = smul.addr %s404, 2
          %s406 = smul.addr %s405, 8
          %s407 = scalar_lea.vmem %s0, %s406
          %s408 = smul.u32 2, %s22
        $region32: #{hgnn_forward.1} parent=27 // pred_fallthru
          _
        // Predicated region
        $region33: #{hgnn_forward.1} parent=27 // pred_check
          %p409 = pneg %p68
        $region34: #{hgnn_forward.1} parent=27 // pred_check_branch
          %411 = sbr.rel (%p409) target = $region36
        $region35: #{hgnn_forward.1} parent=27 // pred_region
          %s412 = smul.u32 2, %s22
          %p413 = scmp.lt.s32.totalorder %s412, 3
          %s414 = scalar_select %p413, %s412, 3
          %s415 = smul.addr %s414, 2
          %s416 = smul.addr %s415, 8
          %s417 = scalar_lea.vmem %s1, %s416
          %s418 = smul.u32 2, %s22
        $region36: #{hgnn_forward.1} parent=27 // pred_fallthru
          _
        // Predicated region
        $region37: #{hgnn_forward.1} parent=27 // pred_check
          %p419 = pneg %p94
        $region38: #{hgnn_forward.1} parent=27 // pred_check_branch
          %421 = sbr.rel (%p419) target = $region40
        $region39: #{hgnn_forward.1} parent=27 // pred_region
          %s422 = smul.u32 2, %s22
          %p423 = scmp.lt.s32.totalorder %s422, 3
          %s424 = scalar_select %p423, %s422, 3
          %s425 = smul.addr %s424, 2
          %s426 = smul.addr %s425, 8
          %s427 = scalar_lea.vmem %s2, %s426
          %s428 = smul.u32 2, %s22
        $region40: #{hgnn_forward.1} parent=27 // pred_fallthru
          _
        // Predicated region
        $region41: #{hgnn_forward.1} parent=27 // pred_check
          %p429 = pneg %p120
        $region42: #{hgnn_forward.1} parent=27 // pred_check_branch
          %431 = sbr.rel (%p429) target = $region44
        $region43: #{hgnn_forward.1} parent=27 // pred_region
          %s432 = smul.u32 2, %s22
          %p433 = scmp.lt.s32.totalorder %s432, 3
          %s434 = scalar_select %p433, %s432, 3
          %s435 = smul.addr %s434, 2
          %s436 = smul.addr %s435, 8
          %s437 = scalar_lea.vmem %s3, %s436
          %s438 = smul.u32 2, %s22
        $region44: #{hgnn_forward.1} parent=27 // pred_fallthru
          _
        // Predicated region
        $region45: #{hgnn_forward.1} parent=27 // pred_check
          %p439 = pneg %p146
        $region46: #{hgnn_forward.1} parent=27 // pred_check_branch
          %441 = sbr.rel (%p439) target = $region48
        $region47: #{hgnn_forward.1} parent=27 // pred_region
          %s442 = smul.u32 2, %s22
          %p443 = scmp.lt.s32.totalorder %s442, 3
          %s444 = scalar_select %p443, %s442, 3
          %s445 = smul.addr %s444, 2
          %s446 = smul.addr %s445, 8
          %s447 = scalar_lea.vmem %s4, %s446
          %s448 = smul.u32 2, %s22
        $region48: #{hgnn_forward.1} parent=27 // pred_fallthru
          _
        // Predicated region
        $region49: #{hgnn_forward.1} parent=27 // pred_check
          %p449 = pneg %p172
        $region50: #{hgnn_forward.1} parent=27 // pred_check_branch
          %451 = sbr.rel (%p449) target = $region52
        $region51: #{hgnn_forward.1} parent=27 // pred_region
          %s452 = smul.u32 2, %s22
          %p453 = scmp.lt.s32.totalorder %s452, 3
          %s454 = scalar_select %p453, %s452, 3
          %s455 = scalar_lea.vmem %s5, %s454
          %s456 = smul.u32 2, %s22
        $region52: #{hgnn_forward.1} parent=27 // pred_fallthru
          _
        // Predicated region
        $region53: #{hgnn_forward.1} parent=27 // pred_check
          %p457 = pneg %p198
        $region54: #{hgnn_forward.1} parent=27 // pred_check_branch
          %459 = sbr.rel (%p457) target = $region56
        $region55: #{hgnn_forward.1} parent=27 // pred_region
          %s460 = smul.u32 2, %s22
          %p461 = scmp.lt.s32.totalorder %s460, 3
          %s462 = scalar_select %p461, %s460, 3
          %s463 = smul.addr %s462, 2
          %s464 = smul.addr %s463, 8
          %s465 = scalar_lea.vmem %s6, %s464
          %s466 = smul.u32 2, %s22
        $region56: #{hgnn_forward.1} parent=27 // pred_fallthru
          _
        // Predicated region
        $region57: #{hgnn_forward.1} parent=27 // pred_check
          %p467 = pneg %p224
        $region58: #{hgnn_forward.1} parent=27 // pred_check_branch
          %469 = sbr.rel (%p467) target = $region60
        $region59: #{hgnn_forward.1} parent=27 // pred_region
          %s470 = smul.u32 2, %s22
          %p471 = scmp.lt.s32.totalorder %s470, 3
          %s472 = scalar_select %p471, %s470, 3
          %s473 = smul.addr %s472, 2
          %s474 = smul.addr %s473, 8
          %s475 = scalar_lea.vmem %s7, %s474
          %s476 = smul.u32 2, %s22
        $region60: #{hgnn_forward.1} parent=27 // pred_fallthru
          _
        // Predicated region
        $region61: #{hgnn_forward.1} parent=27 // pred_check
          %p477 = pneg %p250
        $region62: #{hgnn_forward.1} parent=27 // pred_check_branch
          %479 = sbr.rel (%p477) target = $region64
        $region63: #{hgnn_forward.1} parent=27 // pred_region
          %s480 = smul.u32 2, %s22
          %p481 = scmp.lt.s32.totalorder %s480, 3
          %s482 = scalar_select %p481, %s480, 3
          %s483 = smul.addr %s482, 2
          %s484 = smul.addr %s483, 8
          %s485 = scalar_lea.vmem %s8, %s484
          %s486 = smul.u32 2, %s22
        $region64: #{hgnn_forward.1} parent=27 // pred_fallthru
          _
        // Predicated region
        $region65: #{hgnn_forward.1} parent=27 // pred_check
          %p487 = pneg %p276
        $region66: #{hgnn_forward.1} parent=27 // pred_check_branch
          %489 = sbr.rel (%p487) target = $region68
        $region67: #{hgnn_forward.1} parent=27 // pred_region
          %s490 = smul.u32 2, %s22
          %p491 = scmp.lt.s32.totalorder %s490, 3
          %s492 = scalar_select %p491, %s490, 3
          %s493 = smul.addr %s492, 2
          %s494 = smul.addr %s493, 8
          %s495 = scalar_lea.vmem %s9, %s494
          %s496 = smul.u32 2, %s22
        $region68: #{hgnn_forward.1} parent=27 // pred_fallthru
          _
      $region28: #{hgnn_forward.1} parent=5 // pred_fallthru
        _
      %p497 = scmp.le.s32.totalorder 1, %s22
      %p498 = scmp.lt.s32.totalorder %s22, 3
      %p499 = pnand %p497, %p498
      %p500 = pneg %p499
      // Predicated region
      $region69: #{hgnn_forward.1} parent=5 // pred_check
        _
      $region70: #{hgnn_forward.1} parent=5 // pred_check_branch
        %502 = sbr.rel (%p499) target = $region72
      $region71: #{hgnn_forward.1} parent=5 // pred_region
        %s503 = ssub.s32 %s22, 1
        %s504 = smul.u32 2, %s27
        %p505 = scmp.lt.s32.totalorder %s504, 3
        %s506 = scalar_select %p505, %s504, 3
        %s507 = smul.addr %s506, 2
        %s508 = smul.addr %s507, 8
        %s509 = scalar_lea.vmem %s0, %s508
        %p510 = pneg %p48
        %p511 = pneg %p45
        %s512 = smul.u32 2, %s27
        %p513 = scmp.lt.s32.totalorder %s512, 3
        %s514 = scalar_select %p513, %s512, 3
        %s515 = smul.addr %s514, 2
        %s516 = smul.addr %s515, 8
        %s517 = scalar_lea.vmem %s1, %s516
        %p518 = pneg %p74
        %p519 = pneg %p71
        %s520 = smul.u32 2, %s27
        %p521 = scmp.lt.s32.totalorder %s520, 3
        %s522 = scalar_select %p521, %s520, 3
        %s523 = smul.addr %s522, 2
        %s524 = smul.addr %s523, 8
        %s525 = scalar_lea.vmem %s2, %s524
        %p526 = pneg %p100
        %p527 = pneg %p97
        %s528 = smul.u32 2, %s27
        %p529 = scmp.lt.s32.totalorder %s528, 3
        %s530 = scalar_select %p529, %s528, 3
        %s531 = smul.addr %s530, 2
        %s532 = smul.addr %s531, 8
        %s533 = scalar_lea.vmem %s3, %s532
        %p534 = pneg %p126
        %p535 = pneg %p123
        %s536 = smul.u32 2, %s27
        %p537 = scmp.lt.s32.totalorder %s536, 3
        %s538 = scalar_select %p537, %s536, 3
        %s539 = smul.addr %s538, 2
        %s540 = smul.addr %s539, 8
        %s541 = scalar_lea.vmem %s4, %s540
        %p542 = pneg %p152
        %p543 = pneg %p149
        %s544 = smul.u32 2, %s27
        %p545 = scmp.lt.s32.totalorder %s544, 3
        %s546 = scalar_select %p545, %s544, 3
        %s547 = scalar_lea.vmem %s5, %s546
        %p548 = pneg %p178
        %p549 = pneg %p175
        %s550 = smul.u32 2, %s27
        %p551 = scmp.lt.s32.totalorder %s550, 3
        %s552 = scalar_select %p551, %s550, 3
        %s553 = smul.addr %s552, 2
        %s554 = smul.addr %s553, 8
        %s555 = scalar_lea.vmem %s6, %s554
        %p556 = pneg %p204
        %p557 = pneg %p201
        %s558 = smul.u32 2, %s27
        %p559 = scmp.lt.s32.totalorder %s558, 3
        %s560 = scalar_select %p559, %s558, 3
        %s561 = smul.addr %s560, 2
        %s562 = smul.addr %s561, 8
        %s563 = scalar_lea.vmem %s7, %s562
        %p564 = pneg %p230
        %p565 = pneg %p227
        %s566 = smul.u32 2, %s27
        %p567 = scmp.lt.s32.totalorder %s566, 3
        %s568 = scalar_select %p567, %s566, 3
        %s569 = smul.addr %s568, 2
        %s570 = smul.addr %s569, 8
        %s571 = scalar_lea.vmem %s8, %s570
        %p572 = pneg %p256
        %p573 = pneg %p253
        %s574 = smul.u32 2, %s27
        %p575 = scmp.lt.s32.totalorder %s574, 3
        %s576 = scalar_select %p575, %s574, 3
        %s577 = smul.addr %s576, 2
        %s578 = smul.addr %s577, 8
        %s579 = scalar_lea.vmem %s9, %s578
        %p580 = pneg %p282
        %p581 = pneg %p279
        %p582 = pneg %p303
        %p583 = pneg %p300
        %p584 = pneg %p324
        %p585 = pneg %p321
        %p586 = pneg %p345
        %p587 = pneg %p342
        %p588 = pneg %p371
        %p589 = pneg %p368
        %s590 = sand.u32 %s358, 1
        %s591 = scalar_lea.sflag [#allocation3], %s590
        %s592 = sand.u32 %s358, 1
        %s593 = smul.addr %s592, 8
        %s594 = scalar_lea.vmem [#allocation2], %s593
        %s595 = smul.u32 2, %s27
        %p596 = scmp.lt.s32.totalorder %s595, 3
        %s597 = scalar_select %p596, %s595, 3
        %s598 = smul.addr %s597, 2
        %s599 = smul.addr %s598, 8
        %s600 = scalar_lea.vmem %s0, %s599
        %s601 = smul.u32 2, %s27
        %s602 = smul.u32 2, %s27
        %p603 = scmp.lt.s32.totalorder %s602, 3
        %s604 = scalar_select %p603, %s602, 3
        %s605 = smul.addr %s604, 2
        %s606 = smul.addr %s605, 8
        %s607 = scalar_lea.vmem %s1, %s606
        %s608 = smul.u32 2, %s27
        %s609 = smul.u32 2, %s27
        %p610 = scmp.lt.s32.totalorder %s609, 3
        %s611 = scalar_select %p610, %s609, 3
        %s612 = smul.addr %s611, 2
        %s613 = smul.addr %s612, 8
        %s614 = scalar_lea.vmem %s2, %s613
        %s615 = smul.u32 2, %s27
        %s616 = smul.u32 2, %s27
        %p617 = scmp.lt.s32.totalorder %s616, 3
        %s618 = scalar_select %p617, %s616, 3
        %s619 = smul.addr %s618, 2
        %s620 = smul.addr %s619, 8
        %s621 = scalar_lea.vmem %s3, %s620
        %s622 = smul.u32 2, %s27
        %s623 = smul.u32 2, %s27
        %p624 = scmp.lt.s32.totalorder %s623, 3
        %s625 = scalar_select %p624, %s623, 3
        %s626 = smul.addr %s625, 2
        %s627 = smul.addr %s626, 8
        %s628 = scalar_lea.vmem %s4, %s627
        %s629 = smul.u32 2, %s27
        %s630 = smul.u32 2, %s27
        %p631 = scmp.lt.s32.totalorder %s630, 3
        %s632 = scalar_select %p631, %s630, 3
        %s633 = scalar_lea.vmem %s5, %s632
        %s634 = smul.u32 2, %s27
        %s635 = smul.u32 2, %s27
        %p636 = scmp.lt.s32.totalorder %s635, 3
        %s637 = scalar_select %p636, %s635, 3
        %s638 = smul.addr %s637, 2
        %s639 = smul.addr %s638, 8
        %s640 = scalar_lea.vmem %s6, %s639
        %s641 = smul.u32 2, %s27
        %s642 = smul.u32 2, %s27
        %p643 = scmp.lt.s32.totalorder %s642, 3
        %s644 = scalar_select %p643, %s642, 3
        %s645 = smul.addr %s644, 2
        %s646 = smul.addr %s645, 8
        %s647 = scalar_lea.vmem %s7, %s646
        %s648 = smul.u32 2, %s27
        %s649 = smul.u32 2, %s27
        %p650 = scmp.lt.s32.totalorder %s649, 3
        %s651 = scalar_select %p650, %s649, 3
        %s652 = smul.addr %s651, 2
        %s653 = smul.addr %s652, 8
        %s654 = scalar_lea.vmem %s8, %s653
        %s655 = smul.u32 2, %s27
        %s656 = smul.u32 2, %s27
        %p657 = scmp.lt.s32.totalorder %s656, 3
        %s658 = scalar_select %p657, %s656, 3
        %s659 = smul.addr %s658, 2
        %s660 = smul.addr %s659, 8
        %s661 = scalar_lea.vmem %s9, %s660
        %s662 = smul.u32 2, %s27
        %s663 = smul.u32 2, %s27
        %v664 = vld [vmem:[%s628] sm:$0xff]
        %v665 = vld [vmem:[%s628 + $0x8] sm:$0xff]
        %v666 = vld [vmem:[%s628 + $0x10] sm:$0xff]
        %v667 = vld [vmem:[%s628 + $0x18] sm:$0xff]
        %v668 = vld [vmem:[%s10] sm:$0xff]
        %vm669 = vcmask 64512
        %v671 = vsel %vm669, %v664, 0
        %v674 = vsel %vm669, %v665, 0
        %v677 = vsel %vm669, %v666, 0
        %v680 = vsel %vm669, %v667, 0
        %682 = vmatpush.msra.mxu0 0.0
        %683 = vmatpush.msra.mxu0 0.0
        %684 = vmatpush.msra.mxu0 0.0
        %685 = vmatpush.msra.mxu0 0.0
        %686 = vmatpush.msra.mxu0 0.0
        %687 = vmatpush.msra.mxu0 0.0
        %688 = vmatpush.msra.mxu0 0.0
        %689 = vmatpush.msra.mxu0 0.0
        %690 = vmatpush.msra.mxu0 0.0
        %691 = vmatpush.msra.mxu0 0.0
        %692 = vmatpush.msra.mxu0 0.0
        %693 = vmatpush.msra.mxu0 0.0
        %694 = vmatpush.msra.mxu0 0.0
        %695 = vmatpush.msra.mxu0 0.0
        %696 = vmatpush.msra.mxu0 0.0
        %697 = vmatpush.msra.mxu0 %v668
        %698 = vmatmul.f32.gmra.mxu0 %v671
        %v699 = vpop.f32.mrf.mxu0
        %v700 = vadd.f32 0.0, %v699
        %701 = vmatmul.f32.gmra.mxu0 %v674
        %v702 = vpop.f32.mrf.mxu0
        %v703 = vadd.f32 0.0, %v702
        %704 = vmatmul.f32.gmra.mxu0 %v677
        %v705 = vpop.f32.mrf.mxu0
        %v706 = vadd.f32 0.0, %v705
        %707 = vmatmul.f32.gmra.mxu0 %v680
        %v708 = vpop.f32.mrf.mxu0
        %v709 = vadd.f32 0.0, %v708
        %710 = vdwg.mxu0
        %v711 = vld [vmem:[%s607] sm:$0xff]
        %v712 = vld [vmem:[%s607 + $0x8] sm:$0xff]
        %v713 = vld [vmem:[%s607 + $0x10] sm:$0xff]
        %v714 = vld [vmem:[%s607 + $0x18] sm:$0xff]
        %vm715 = vcmask 130048
        %v717 = vsel %vm715, %v711, 0
        %v720 = vsel %vm715, %v712, 0
        %722 = vmatpush.msra.mxu0 0.0
        %723 = vmatpush.msra.mxu0 0.0
        %724 = vmatpush.msra.mxu0 0.0
        %725 = vmatpush.msra.mxu0 0.0
        %726 = vmatpush.msra.mxu0 0.0
        %727 = vmatpush.msra.mxu0 0.0
        %728 = vmatpush.msra.mxu0 0.0
        %729 = vmatpush.msra.mxu0 0.0
        %730 = vmatpush.msra.mxu0 0.0
        %731 = vmatpush.msra.mxu0 0.0
        %732 = vmatpush.msra.mxu0 0.0
        %733 = vmatpush.msra.mxu0 0.0
        %734 = vmatpush.msra.mxu0 0.0
        %735 = vmatpush.msra.mxu0 0.0
        %736 = vmatpush.msra.mxu0 %v703
        %737 = vmatpush.msra.mxu0 %v700
        %738 = vmatmul.f32.gmra.mxu0 %v717
        %v739 = vpop.f32.mrf.mxu0
        %v740 = vadd.f32 0.0, %v739
        %741 = vmatmul.f32.gmra.mxu0 %v720
        %v742 = vpop.f32.mrf.mxu0
        %v743 = vadd.f32 0.0, %v742
        %744 = vdwg.mxu0
        %v746 = vsel %vm715, %v713, 0
        %v749 = vsel %vm715, %v714, 0
        %751 = vmatpush.msra.mxu0 0.0
        %752 = vmatpush.msra.mxu0 0.0
        %753 = vmatpush.msra.mxu0 0.0
        %754 = vmatpush.msra.mxu0 0.0
        %755 = vmatpush.msra.mxu0 0.0
        %756 = vmatpush.msra.mxu0 0.0
        %757 = vmatpush.msra.mxu0 0.0
        %758 = vmatpush.msra.mxu0 0.0
        %759 = vmatpush.msra.mxu0 0.0
        %760 = vmatpush.msra.mxu0 0.0
        %761 = vmatpush.msra.mxu0 0.0
        %762 = vmatpush.msra.mxu0 0.0
        %763 = vmatpush.msra.mxu0 0.0
        %764 = vmatpush.msra.mxu0 0.0
        %765 = vmatpush.msra.mxu0 %v709
        %766 = vmatpush.msra.mxu0 %v706
        %767 = vmatmul.f32.gmra.mxu0 %v746
        %v768 = vpop.f32.mrf.mxu0
        %v769 = vadd.f32 0.0, %v768
        %770 = vmatmul.f32.gmra.mxu0 %v749
        %v771 = vpop.f32.mrf.mxu0
        %v772 = vadd.f32 0.0, %v771
        %773 = vdwg.mxu0
        %v774 = vld [vmem:[%s640] sm:$0xff]
        %v775 = vld [vmem:[%s640 + $0x8] sm:$0xff]
        %v776 = vld [vmem:[%s640 + $0x10] sm:$0xff]
        %v777 = vld [vmem:[%s640 + $0x18] sm:$0xff]
        %779 = vset.pattern.permute.xlu0 0
        %780 = vperm.xlu0 %779, %v774
        %v781 = vpop.permute.xlu0 %780
        %784 = vset.pattern.permute.xlu0 0
        %785 = vperm.xlu0 %784, %v775
        %v786 = vpop.permute.xlu0 %785
        %789 = vset.pattern.permute.xlu0 0
        %790 = vperm.xlu0 %789, %v776
        %v791 = vpop.permute.xlu0 %790
        %794 = vset.pattern.permute.xlu0 0
        %795 = vperm.xlu0 %794, %v777
        %v796 = vpop.permute.xlu0 %795
        %v798 = vmul.f32 %v740, %v781
        %v799 = vmul.f32 %v743, %v786
        %v800 = vmul.f32 %v769, %v791
        %v801 = vmul.f32 %v772, %v796
        %v802 = vld [vmem:[%s600] sm:$0xff]
        %v803 = vld [vmem:[%s600 + $0x8] sm:$0xff]
        %v804 = vld [vmem:[%s600 + $0x10] sm:$0xff]
        %v805 = vld [vmem:[%s600 + $0x18] sm:$0xff]
        %v807 = vsel %vm715, %v802, 0
        %v810 = vsel %vm715, %v803, 0
        %812 = vmatpush.msra.mxu0 0.0
        %813 = vmatpush.msra.mxu0 0.0
        %814 = vmatpush.msra.mxu0 0.0
        %815 = vmatpush.msra.mxu0 0.0
        %816 = vmatpush.msra.mxu0 0.0
        %817 = vmatpush.msra.mxu0 0.0
        %818 = vmatpush.msra.mxu0 0.0
        %819 = vmatpush.msra.mxu0 0.0
        %820 = vmatpush.msra.mxu0 0.0
        %821 = vmatpush.msra.mxu0 0.0
        %822 = vmatpush.msra.mxu0 0.0
        %823 = vmatpush.msra.mxu0 0.0
        %824 = vmatpush.msra.mxu0 0.0
        %825 = vmatpush.msra.mxu0 0.0
        %826 = vmatpush.msra.mxu0 %v799
        %827 = vmatpush.msra.mxu0 %v798
        %828 = vmatmul.f32.gmra.mxu0 %v807
        %v829 = vpop.f32.mrf.mxu0
        %v830 = vadd.f32 0.0, %v829
        %831 = vmatmul.f32.gmra.mxu0 %v810
        %v832 = vpop.f32.mrf.mxu0
        %v833 = vadd.f32 0.0, %v832
        %834 = vdwg.mxu0
        %v836 = vsel %vm715, %v804, 0
        %v839 = vsel %vm715, %v805, 0
        %841 = vmatpush.msra.mxu0 0.0
        %842 = vmatpush.msra.mxu0 0.0
        %843 = vmatpush.msra.mxu0 0.0
        %844 = vmatpush.msra.mxu0 0.0
        %845 = vmatpush.msra.mxu0 0.0
        %846 = vmatpush.msra.mxu0 0.0
        %847 = vmatpush.msra.mxu0 0.0
        %848 = vmatpush.msra.mxu0 0.0
        %849 = vmatpush.msra.mxu0 0.0
        %850 = vmatpush.msra.mxu0 0.0
        %851 = vmatpush.msra.mxu0 0.0
        %852 = vmatpush.msra.mxu0 0.0
        %853 = vmatpush.msra.mxu0 0.0
        %854 = vmatpush.msra.mxu0 0.0
        %855 = vmatpush.msra.mxu0 %v801
        %856 = vmatpush.msra.mxu0 %v800
        %857 = vmatmul.f32.gmra.mxu0 %v836
        %v858 = vpop.f32.mrf.mxu0
        %v859 = vadd.f32 0.0, %v858
        %860 = vmatmul.f32.gmra.mxu0 %v839
        %v861 = vpop.f32.mrf.mxu0
        %v862 = vadd.f32 0.0, %v861
        %863 = vdwg.mxu0
        %v864 = vld [vmem:[%s654] sm:$0xff]
        %v865 = vld [vmem:[%s654 + $0x8] sm:$0xff]
        %v866 = vld [vmem:[%s654 + $0x10] sm:$0xff]
        %v867 = vld [vmem:[%s654 + $0x18] sm:$0xff]
        %869 = vset.pattern.permute.xlu0 0
        %870 = vperm.xlu0 %869, %v864
        %v871 = vpop.permute.xlu0 %870
        %874 = vset.pattern.permute.xlu0 0
        %875 = vperm.xlu0 %874, %v865
        %v876 = vpop.permute.xlu0 %875
        %879 = vset.pattern.permute.xlu0 0
        %880 = vperm.xlu0 %879, %v866
        %v881 = vpop.permute.xlu0 %880
        %884 = vset.pattern.permute.xlu0 0
        %885 = vperm.xlu0 %884, %v867
        %v886 = vpop.permute.xlu0 %885
        %v888 = vmul.f32 %v830, %v871
        %v889 = vmul.f32 %v833, %v876
        %v890 = vmul.f32 %v859, %v881
        %v891 = vmul.f32 %v862, %v886
        %v892 = vld [vmem:[%s621] sm:$0xff]
        %v893 = vld [vmem:[%s621 + $0x8] sm:$0xff]
        %v894 = vld [vmem:[%s621 + $0x10] sm:$0xff]
        %v895 = vld [vmem:[%s621 + $0x18] sm:$0xff]
        %898 = vrot.lane.b32.xlu0 %v700, 120
        %v899 = vpop.permute.xlu0 %898
        %900 = vrot.lane.b32.xlu0 %v703, 120
        %v901 = vpop.permute.xlu0 %900
        %v905 = vsel %vm715, %v892, 0
        %v908 = vsel %vm715, %v893, 0
        %910 = vmatpush.msra.mxu0 0.0
        %911 = vmatpush.msra.mxu0 0.0
        %912 = vmatpush.msra.mxu0 0.0
        %913 = vmatpush.msra.mxu0 0.0
        %914 = vmatpush.msra.mxu0 0.0
        %915 = vmatpush.msra.mxu0 0.0
        %916 = vmatpush.msra.mxu0 0.0
        %917 = vmatpush.msra.mxu0 0.0
        %918 = vmatpush.msra.mxu0 0.0
        %919 = vmatpush.msra.mxu0 0.0
        %920 = vmatpush.msra.mxu0 0.0
        %921 = vmatpush.msra.mxu0 0.0
        %922 = vmatpush.msra.mxu0 0.0
        %923 = vmatpush.msra.mxu0 0.0
        %924 = vmatpush.msra.mxu0 %v901
        %925 = vmatpush.msra.mxu0 %v899
        %926 = vmatmul.f32.gmra.mxu0 %v905
        %v927 = vpop.f32.mrf.mxu0
        %v928 = vadd.f32 0.0, %v927
        %929 = vmatmul.f32.gmra.mxu0 %v908
        %v930 = vpop.f32.mrf.mxu0
        %v931 = vadd.f32 0.0, %v930
        %932 = vdwg.mxu0
        %935 = vrot.lane.b32.xlu0 %v706, 120
        %v936 = vpop.permute.xlu0 %935
        %937 = vrot.lane.b32.xlu0 %v709, 120
        %v938 = vpop.permute.xlu0 %937
        %v942 = vsel %vm715, %v894, 0
        %v945 = vsel %vm715, %v895, 0
        %947 = vmatpush.msra.mxu0 0.0
        %948 = vmatpush.msra.mxu0 0.0
        %949 = vmatpush.msra.mxu0 0.0
        %950 = vmatpush.msra.mxu0 0.0
        %951 = vmatpush.msra.mxu0 0.0
        %952 = vmatpush.msra.mxu0 0.0
        %953 = vmatpush.msra.mxu0 0.0
        %954 = vmatpush.msra.mxu0 0.0
        %955 = vmatpush.msra.mxu0 0.0
        %956 = vmatpush.msra.mxu0 0.0
        %957 = vmatpush.msra.mxu0 0.0
        %958 = vmatpush.msra.mxu0 0.0
        %959 = vmatpush.msra.mxu0 0.0
        %960 = vmatpush.msra.mxu0 0.0
        %961 = vmatpush.msra.mxu0 %v938
        %962 = vmatpush.msra.mxu0 %v936
        %963 = vmatmul.f32.gmra.mxu0 %v942
        %v964 = vpop.f32.mrf.mxu0
        %v965 = vadd.f32 0.0, %v964
        %966 = vmatmul.f32.gmra.mxu0 %v945
        %v967 = vpop.f32.mrf.mxu0
        %v968 = vadd.f32 0.0, %v967
        %969 = vdwg.mxu0
        %v970 = vld [vmem:[%s647] sm:$0xff]
        %v971 = vld [vmem:[%s647 + $0x8] sm:$0xff]
        %v972 = vld [vmem:[%s647 + $0x10] sm:$0xff]
        %v973 = vld [vmem:[%s647 + $0x18] sm:$0xff]
        %975 = vset.pattern.permute.xlu0 0
        %976 = vperm.xlu0 %975, %v970
        %v977 = vpop.permute.xlu0 %976
        %980 = vset.pattern.permute.xlu0 0
        %981 = vperm.xlu0 %980, %v971
        %v982 = vpop.permute.xlu0 %981
        %985 = vset.pattern.permute.xlu0 0
        %986 = vperm.xlu0 %985, %v972
        %v987 = vpop.permute.xlu0 %986
        %990 = vset.pattern.permute.xlu0 0
        %991 = vperm.xlu0 %990, %v973
        %v992 = vpop.permute.xlu0 %991
        %v994 = vmul.f32 %v928, %v977
        %v995 = vmul.f32 %v931, %v982
        %v996 = vmul.f32 %v965, %v987
        %v997 = vmul.f32 %v968, %v992
        %v998 = vld [vmem:[%s614] sm:$0xff]
        %v999 = vld [vmem:[%s614 + $0x8] sm:$0xff]
        %v1000 = vld [vmem:[%s614 + $0x10] sm:$0xff]
        %v1001 = vld [vmem:[%s614 + $0x18] sm:$0xff]
        %v1003 = vsel %vm715, %v998, 0
        %v1006 = vsel %vm715, %v999, 0
        %1008 = vmatpush.msra.mxu0 0.0
        %1009 = vmatpush.msra.mxu0 0.0
        %1010 = vmatpush.msra.mxu0 0.0
        %1011 = vmatpush.msra.mxu0 0.0
        %1012 = vmatpush.msra.mxu0 0.0
        %1013 = vmatpush.msra.mxu0 0.0
        %1014 = vmatpush.msra.mxu0 0.0
        %1015 = vmatpush.msra.mxu0 0.0
        %1016 = vmatpush.msra.mxu0 0.0
        %1017 = vmatpush.msra.mxu0 0.0
        %1018 = vmatpush.msra.mxu0 0.0
        %1019 = vmatpush.msra.mxu0 0.0
        %1020 = vmatpush.msra.mxu0 0.0
        %1021 = vmatpush.msra.mxu0 0.0
        %1022 = vmatpush.msra.mxu0 %v995
        %1023 = vmatpush.msra.mxu0 %v994
        %1024 = vmatmul.f32.gmra.mxu0 %v1003
        %v1025 = vpop.f32.mrf.mxu0
        %v1026 = vadd.f32 0.0, %v1025
        %1027 = vmatmul.f32.gmra.mxu0 %v1006
        %v1028 = vpop.f32.mrf.mxu0
        %v1029 = vadd.f32 0.0, %v1028
        %1030 = vdwg.mxu0
        %v1032 = vsel %vm715, %v1000, 0
        %v1035 = vsel %vm715, %v1001, 0
        %1037 = vmatpush.msra.mxu0 0.0
        %1038 = vmatpush.msra.mxu0 0.0
        %1039 = vmatpush.msra.mxu0 0.0
        %1040 = vmatpush.msra.mxu0 0.0
        %1041 = vmatpush.msra.mxu0 0.0
        %1042 = vmatpush.msra.mxu0 0.0
        %1043 = vmatpush.msra.mxu0 0.0
        %1044 = vmatpush.msra.mxu0 0.0
        %1045 = vmatpush.msra.mxu0 0.0
        %1046 = vmatpush.msra.mxu0 0.0
        %1047 = vmatpush.msra.mxu0 0.0
        %1048 = vmatpush.msra.mxu0 0.0
        %1049 = vmatpush.msra.mxu0 0.0
        %1050 = vmatpush.msra.mxu0 0.0
        %1051 = vmatpush.msra.mxu0 %v997
        %1052 = vmatpush.msra.mxu0 %v996
        %1053 = vmatmul.f32.gmra.mxu0 %v1032
        %v1054 = vpop.f32.mrf.mxu0
        %v1055 = vadd.f32 0.0, %v1054
        %1056 = vmatmul.f32.gmra.mxu0 %v1035
        %v1057 = vpop.f32.mrf.mxu0
        %v1058 = vadd.f32 0.0, %v1057
        %1059 = vdwg.mxu0
        %v1060 = vld [vmem:[%s661] sm:$0xff]
        %v1061 = vld [vmem:[%s661 + $0x8] sm:$0xff]
        %v1062 = vld [vmem:[%s661 + $0x10] sm:$0xff]
        %v1063 = vld [vmem:[%s661 + $0x18] sm:$0xff]
        %1065 = vset.pattern.permute.xlu0 0
        %1066 = vperm.xlu0 %1065, %v1060
        %v1067 = vpop.permute.xlu0 %1066
        %1070 = vset.pattern.permute.xlu0 0
        %1071 = vperm.xlu0 %1070, %v1061
        %v1072 = vpop.permute.xlu0 %1071
        %1075 = vset.pattern.permute.xlu0 0
        %1076 = vperm.xlu0 %1075, %v1062
        %v1077 = vpop.permute.xlu0 %1076
        %1080 = vset.pattern.permute.xlu0 0
        %1081 = vperm.xlu0 %1080, %v1063
        %v1082 = vpop.permute.xlu0 %1081
        %v1084 = vmul.f32 %v1026, %v1067
        %v1085 = vmul.f32 %v1029, %v1072
        %v1086 = vmul.f32 %v1055, %v1077
        %v1087 = vmul.f32 %v1058, %v1082
        %v1088 = vadd.f32 %v888, %v1084
        %v1089 = vadd.f32 %v889, %v1085
        %v1090 = vadd.f32 %v890, %v1086
        %v1091 = vadd.f32 %v891, %v1087
        %v1092 = vld [vmem:[%s11] sm:$0xf]
        %v1094 = vsel %vm669, %v1088, 0
        %v1097 = vsel %vm669, %v1089, 0
        %v1100 = vsel %vm669, %v1090, 0
        %v1103 = vsel %vm669, %v1091, 0
        %v1106 = vsel %vm669, %v1092, 0
        %1108 = vmatpush.xpose.msra.mxu0 0.0
        %1109 = vmatpush.xpose.msra.mxu0 0.0
        %1110 = vmatpush.xpose.msra.mxu0 0.0
        %1111 = vmatpush.xpose.msra.mxu0 0.0
        %1112 = vmatpush.xpose.msra.mxu0 0.0
        %1113 = vmatpush.xpose.msra.mxu0 0.0
        %1114 = vmatpush.xpose.msra.mxu0 0.0
        %1115 = vmatpush.xpose.msra.mxu0 0.0
        %1116 = vmatpush.xpose.msra.mxu0 0.0
        %1117 = vmatpush.xpose.msra.mxu0 0.0
        %1118 = vmatpush.xpose.msra.mxu0 0.0
        %1119 = vmatpush.xpose.msra.mxu0 0.0
        %1120 = vmatpush.xpose.msra.mxu0 0.0
        %1121 = vmatpush.xpose.msra.mxu0 0.0
        %1122 = vmatpush.xpose.msra.mxu0 0.0
        %1123 = vmatpush.xpose.msra.mxu0 %v1106
        %1124 = vmatmul.f32.gmra.mxu0 %v1094
        %v1125 = vpop.f32.mrf.mxu0
        %v1126 = vadd.f32 0.0, %v1125
        %1127 = vmatmul.f32.gmra.mxu0 %v1097
        %v1128 = vpop.f32.mrf.mxu0
        %v1129 = vadd.f32 0.0, %v1128
        %1130 = vmatmul.f32.gmra.mxu0 %v1100
        %v1131 = vpop.f32.mrf.mxu0
        %v1132 = vadd.f32 0.0, %v1131
        %1133 = vmatmul.f32.gmra.mxu0 %v1103
        %v1134 = vpop.f32.mrf.mxu0
        %v1135 = vadd.f32 0.0, %v1134
        %1136 = vdwg.mxu0
        %1137 = vxpose.xlu0.b32.start [1/16] %v1126, 128
        %1138 = vxpose.xlu0.b32.cont [2/16] %v1129, 128
        %1139 = vxpose.xlu0.b32.cont [3/16] 0.0, 128
        %1140 = vxpose.xlu0.b32.cont [4/16] 0.0, 128
        %1141 = vxpose.xlu0.b32.cont [5/16] 0.0, 128
        %1142 = vxpose.xlu0.b32.cont [6/16] 0.0, 128
        %1143 = vxpose.xlu0.b32.cont [7/16] 0.0, 128
        %1144 = vxpose.xlu0.b32.cont [8/16] 0.0, 128
        %1145 = vxpose.xlu0.b32.cont [9/16] 0.0, 128
        %1146 = vxpose.xlu0.b32.cont [10/16] 0.0, 128
        %1147 = vxpose.xlu0.b32.cont [11/16] 0.0, 128
        %1148 = vxpose.xlu0.b32.cont [12/16] 0.0, 128
        %1149 = vxpose.xlu0.b32.cont [13/16] 0.0, 128
        %1150 = vxpose.xlu0.b32.cont [14/16] 0.0, 128
        %1151 = vxpose.xlu0.b32.cont [15/16] 0.0, 128
        %1152 = vxpose.xlu0.b32.end [16/16] 0.0, 128
        %v1153 = vpop.trf.xlu0
        %v1154 = vpop.trf.xlu0
        %v1155 = vpop.trf.xlu0
        %v1156 = vpop.trf.xlu0
        %v1157 = vpop.trf.xlu0
        %v1158 = vpop.trf.xlu0
        %v1159 = vpop.trf.xlu0
        %v1160 = vpop.trf.xlu0
        %v1161 = vpop.trf.xlu0
        %v1162 = vpop.trf.xlu0
        %v1163 = vpop.trf.xlu0
        %v1164 = vpop.trf.xlu0
        %v1165 = vpop.trf.xlu0
        %v1166 = vpop.trf.xlu0
        %v1167 = vpop.trf.xlu0
        %v1168 = vpop.trf.xlu0
        %1169 = vxpose.xlu0.b32.start [1/16] %v1132, 128
        %1170 = vxpose.xlu0.b32.cont [2/16] %v1135, 128
        %1171 = vxpose.xlu0.b32.cont [3/16] 0.0, 128
        %1172 = vxpose.xlu0.b32.cont [4/16] 0.0, 128
        %1173 = vxpose.xlu0.b32.cont [5/16] 0.0, 128
        %1174 = vxpose.xlu0.b32.cont [6/16] 0.0, 128
        %1175 = vxpose.xlu0.b32.cont [7/16] 0.0, 128
        %1176 = vxpose.xlu0.b32.cont [8/16] 0.0, 128
        %1177 = vxpose.xlu0.b32.cont [9/16] 0.0, 128
        %1178 = vxpose.xlu0.b32.cont [10/16] 0.0, 128
        %1179 = vxpose.xlu0.b32.cont [11/16] 0.0, 128
        %1180 = vxpose.xlu0.b32.cont [12/16] 0.0, 128
        %1181 = vxpose.xlu0.b32.cont [13/16] 0.0, 128
        %1182 = vxpose.xlu0.b32.cont [14/16] 0.0, 128
        %1183 = vxpose.xlu0.b32.cont [15/16] 0.0, 128
        %1184 = vxpose.xlu0.b32.end [16/16] 0.0, 128
        %v1185 = vpop.trf.xlu0
        %v1186 = vpop.trf.xlu0
        %v1187 = vpop.trf.xlu0
        %v1188 = vpop.trf.xlu0
        %v1189 = vpop.trf.xlu0
        %v1190 = vpop.trf.xlu0
        %v1191 = vpop.trf.xlu0
        %v1192 = vpop.trf.xlu0
        %v1193 = vpop.trf.xlu0
        %v1194 = vpop.trf.xlu0
        %v1195 = vpop.trf.xlu0
        %v1196 = vpop.trf.xlu0
        %v1197 = vpop.trf.xlu0
        %v1198 = vpop.trf.xlu0
        %v1199 = vpop.trf.xlu0
        %v1200 = vpop.trf.xlu0
        %v1201 = vld [vmem:[%s12] sm:$0xf]
        %1203 = vset.pattern.permute.xlu0 0
        %1204 = vperm.xlu0 %1203, %v1201
        %v1205 = vpop.permute.xlu0 %1204
        %v1207 = vadd.f32 %v1153, %v1205
        %v1208 = vadd.f32 %v1185, %v1205
        %v1209 = vmul.f32 %v1207, 0.5
        %v1210 = vmul.f32 %v1208, 0.5
        %v1211 = vmul.f32 %v1207, 0.70710677
        %v1212 = vmul.f32 %v1208, 0.70710677
        %v1213 = vand.u32 2147483647, %v1211
        %v1214 = vand.u32 2147483647, %v1212
        %v1215 = vmul.f32 %v1213, 0.3275911
        %v1216 = vmul.f32 %v1214, 0.3275911
        %v1217 = vadd.f32 %v1215, 1.0
        %v1218 = vadd.f32 %v1216, 1.0
        %v1219 = vrcp.pop %v1217
        %v1220 = vmul.f32 %v1217, %v1219
        %v1221 = vsub.f32 1.0, %v1220
        %v1222 = vmul.f32 %v1219, %v1221
        %v1223 = vadd.f32 %v1219, %v1222
        %vm1224 = vweird.f32 %v1217
        %vm1225 = vweird.f32 %v1219
        %vm1226 = vmor %vm1224, %vm1225
        %v1227 = vsel %vm1226, %v1219, %v1223
        %v1228 = vand.u32 2147483647, %v1217
        %vm1229 = vcmp.eq.f32.partialorder %v1228, 8.507059e+37
        %v1230 = vand.u32 %v1217, 2147483648
        %v1231 = vor.u32 1.1754944e-38, %v1230
        %v1232 = vsel %vm1229, %v1231, %v1227
        %v1233 = vmul.f32 1.0, %v1232
        %v1234 = vrcp.pop %v1218
        %v1235 = vmul.f32 %v1218, %v1234
        %v1236 = vsub.f32 1.0, %v1235
        %v1237 = vmul.f32 %v1234, %v1236
        %v1238 = vadd.f32 %v1234, %v1237
        %vm1239 = vweird.f32 %v1218
        %vm1240 = vweird.f32 %v1234
        %vm1241 = vmor %vm1239, %vm1240
        %v1242 = vsel %vm1241, %v1234, %v1238
        %v1243 = vand.u32 2147483647, %v1218
        %vm1244 = vcmp.eq.f32.partialorder %v1243, 8.507059e+37
        %v1245 = vand.u32 %v1218, 2147483648
        %v1246 = vor.u32 1.1754944e-38, %v1245
        %v1247 = vsel %vm1244, %v1246, %v1242
        %v1248 = vmul.f32 1.0, %v1247
        %v1249 = vmul.f32 %v1233, 1.0614054
        %v1250 = vmul.f32 %v1248, 1.0614054
        %v1251 = vadd.f32 %v1249, -1.4531521
        %v1252 = vadd.f32 %v1250, -1.4531521
        %v1253 = vmul.f32 %v1251, %v1233
        %v1254 = vmul.f32 %v1252, %v1248
        %v1255 = vadd.f32 %v1253, 1.4214138
        %v1256 = vadd.f32 %v1254, 1.4214138
        %v1257 = vmul.f32 %v1255, %v1233
        %v1258 = vmul.f32 %v1256, %v1248
        %v1259 = vadd.f32 %v1257, -0.28449672
        %v1260 = vadd.f32 %v1258, -0.28449672
        %v1261 = vmul.f32 %v1259, %v1233
        %v1262 = vmul.f32 %v1260, %v1248
        %v1263 = vadd.f32 %v1261, 0.2548296
        %v1264 = vadd.f32 %v1262, 0.2548296
        %v1265 = vmul.f32 %v1263, %v1233
        %v1266 = vmul.f32 %v1264, %v1248
        %v1267 = vsub.f32 0.0, %v1213
        %v1268 = vsub.f32 0.0, %v1214
        %v1269 = vmul.f32 %v1267, %v1213
        %v1270 = vmul.f32 %v1268, %v1214
        %v1271 = vmul.f32 %v1269, 1.442695
        %v1272 = vpow.pop %v1271
        %v1273 = vmul.f32 %v1270, 1.442695
        %v1274 = vpow.pop %v1273
        %v1275 = vmul.f32 %v1265, %v1272
        %v1276 = vmul.f32 %v1266, %v1274
        %v1277 = vsub.f32 1.0, %v1275
        %v1278 = vsub.f32 1.0, %v1276
        %vm1279 = vcmp.ge.f32.partialorder %v1211, 0.0
        %vm1280 = vcmp.ge.f32.partialorder %v1212, 0.0
        %v1281 = vsub.f32 0.0, %v1277
        %v1282 = vsub.f32 0.0, %v1278
        %v1283 = vsel %vm1279, %v1277, %v1281
        %v1284 = vsel %vm1280, %v1278, %v1282
        %v1285 = vadd.f32 %v1283, 1.0
        %v1286 = vadd.f32 %v1284, 1.0
        %v1287 = vmul.f32 %v1209, %v1285
        %v1288 = vmul.f32 %v1210, %v1286
        %v1289 = vld [vmem:[%s633] sm:$0x1]
        %v1290 = vld [vmem:[%s633 + $0x1] sm:$0x1]
        %v1293 = vperm.slane %v1289, 0
        %v1294 = vperm.slane %v1290, 0
        %v1297 = vmul.f32 %v1287, %v1293
        %v1298 = vmul.f32 %v1288, %v1294
        %v1299 = vsub.f32 0.0, %v1297
        %v1300 = vsub.f32 0.0, %v1298
        %v1301 = vmul.f32 %v1299, 1.442695
        %v1302 = vpow.pop %v1301
        %v1303 = vmul.f32 %v1300, 1.442695
        %v1304 = vpow.pop %v1303
        %v1305 = vadd.f32 %v1302, 1.0
        %v1306 = vadd.f32 %v1304, 1.0
        %v1307 = vrcp.pop %v1305
        %v1308 = vmul.f32 %v1305, %v1307
        %v1309 = vsub.f32 1.0, %v1308
        %v1310 = vmul.f32 %v1307, %v1309
        %v1311 = vadd.f32 %v1307, %v1310
        %vm1312 = vweird.f32 %v1305
        %vm1313 = vweird.f32 %v1307
        %vm1314 = vmor %vm1312, %vm1313
        %v1315 = vsel %vm1314, %v1307, %v1311
        %v1316 = vand.u32 2147483647, %v1305
        %vm1317 = vcmp.eq.f32.partialorder %v1316, 8.507059e+37
        %v1318 = vand.u32 %v1305, 2147483648
        %v1319 = vor.u32 1.1754944e-38, %v1318
        %v1320 = vsel %vm1317, %v1319, %v1315
        %v1321 = vmul.f32 1.0, %v1320
        %v1322 = vrcp.pop %v1306
        %v1323 = vmul.f32 %v1306, %v1322
        %v1324 = vsub.f32 1.0, %v1323
        %v1325 = vmul.f32 %v1322, %v1324
        %v1326 = vadd.f32 %v1322, %v1325
        %vm1327 = vweird.f32 %v1306
        %vm1328 = vweird.f32 %v1322
        %vm1329 = vmor %vm1327, %vm1328
        %v1330 = vsel %vm1329, %v1322, %v1326
        %v1331 = vand.u32 2147483647, %v1306
        %vm1332 = vcmp.eq.f32.partialorder %v1331, 8.507059e+37
        %v1333 = vand.u32 %v1306, 2147483648
        %v1334 = vor.u32 1.1754944e-38, %v1333
        %v1335 = vsel %vm1332, %v1334, %v1330
        %v1336 = vmul.f32 1.0, %v1335
        %vm1337 = vcmask 125952
        %1338 = vst.msk [vmem:[%s594] sm:$0xf] %vm1337, %v1321
        %1339 = vst.msk [vmem:[%s594 + $0x4] sm:$0xf] %vm1337, %v1336
        %s1340 = sand.u32 %s358, 1
        %s1341 = scalar_lea.sflag [#allocation3], %s1340
        %s1342 = sand.u32 %s358, 1
        %s1343 = smul.addr %s1342, 8
        %s1344 = scalar_lea.vmem [#allocation2], %s1343
        // Predicated region
        $region73: #{hgnn_forward.1} parent=71 // pred_check
          %p1345 = pneg %p368
        $region74: #{hgnn_forward.1} parent=71 // pred_check_branch
          %1347 = sbr.rel (%p1345) target = $region76
        $region75: #{hgnn_forward.1} parent=71 // pred_region
          %s1348 = smul.u32 2, %s27
          %1350 = vsyncadd %s1341, 0
          %s1351 = smul.addr %s1348, 4
          %s1352 = scalar_lea.hbm %s13, %s1351
          %s1353 = sshll.u32 %s1344, 4
          %s1354 = int_to_ptr.vmem [resolvable:$true] %s1353
          %s1355 = sshll.u32 %s1352, 4
          %s1356 = int_to_ptr.hbm [resolvable:$true] %s1355
          %1361 = dma.vmem_to_hbm [thread:$0]  %s1354, 128, %s1356, %s1341, 64, 64, 4
        $region76: #{hgnn_forward.1} parent=71 // pred_fallthru
          _
      $region72: #{hgnn_forward.1} parent=5 // pred_fallthru
        _
      %p1362 = scmp.le.s32.totalorder 2, %s22
      // Predicated region
      $region77: #{hgnn_forward.1} parent=5 // pred_check
        %p1363 = pneg %p1362
      $region78: #{hgnn_forward.1} parent=5 // pred_check_branch
        %1365 = sbr.rel (%p1363) target = $region80
      $region79: #{hgnn_forward.1} parent=5 // pred_region
        %s1366 = ssub.s32 %s22, 2
        // Predicated region
        $region81: #{hgnn_forward.1} parent=79 // pred_check
          %p1367 = pneg %p374
        $region82: #{hgnn_forward.1} parent=79 // pred_check_branch
          %1369 = sbr.rel (%p1367) target = $region84
        $region83: #{hgnn_forward.1} parent=79 // pred_region
          %s1370 = sand.u32 %s359, 1
          %s1371 = scalar_lea.sflag [#allocation3], %s1370
          %s1372 = sand.u32 %s359, 1
          %s1373 = smul.addr %s1372, 8
          %s1374 = scalar_lea.vmem [#allocation2], %s1373
          %1376 = dma.done %s1371, 128
        $region84: #{hgnn_forward.1} parent=79 // pred_fallthru
          _
      $region80: #{hgnn_forward.1} parent=5 // pred_fallthru
        _
    $region6: #{hgnn_forward.1} parent=1 // loop_footer
      %s26 = sadd.s32 1, %s22
    $region7: #{hgnn_forward.1} parent=1 // loop_footer_branch
      %21 = sbr.rel target = $region3
    $region8: #{hgnn_forward.1} parent=1 // loop_exit
      _
    %1377 = vsyncpa [#allocation3], 1
    %s1378 = scalar_lea.sflag [#allocation3], 1
    %1379 = vsyncpa %s1378, 1

</llo_original>
